<compile_context>
chip_gen: v7x
topology: tpu7x:2x2x1
jax: 0.10.0
libtpu: 0.0.40
codegen_flags: <defaults>
</compile_context>

<pallas_src>
import math

import jax
import jax.numpy as jnp
from jax.experimental import pallas as pl
from jax.experimental.pallas import tpu as pltpu


def _round_up(n, m):
    return ((n + m - 1) // m) * m


def _fused_mlp_kernel(x_ref, *refs):
    """Fused MLP: hidden layers = ReLU(x @ W + b), output layer = sigmoid(x @ W + b).

    refs = (w0, b0, w1, b1, ..., w_{L-1}, b_{L-1}, o_ref). Matmuls run on the MXU with
    f32 accumulation; bias add + activations stay in f32 on the VPU/EUP. All
    intermediate activations live in vregs/VMEM (no HBM round trips).
    """
    o_ref = refs[-1]
    n_layers = (len(refs) - 1) // 2
    h = x_ref[...]
    for i in range(n_layers):
        w = refs[2 * i][...]
        b = refs[2 * i + 1][...]  # (1, d_out) -> broadcasts over the batch tile
        lhs = h if h.dtype == w.dtype else h.astype(w.dtype)  # no-op in the f32 path
        y = jnp.dot(lhs, w, preferred_element_type=jnp.float32) + b
        h = jax.nn.sigmoid(y) if i == n_layers - 1 else jnp.maximum(y, 0.0)
    o_ref[...] = h.astype(o_ref.dtype)


def prepare_policy_params(params, compute_dtype=jnp.float32):
    """One-time (init-time) parameter preparation -- hoisted out of the per-step forward.

    Weights stay pre-transposed as [d_in, d_out] (PyTorch nn.Linear: y = x @ W^T + b,
    so W^T is what we store). Biases are reshaped to (1, d_out). Optionally pre-cast
    weights to bf16 for v6e/v7x MXU throughput; biases/activations always stay f32.
    No zero-padding is needed: every weight/bias block is full-extent in the kernel.
    """
    prepared = []
    for w_t, b in params:
        prepared.append(
            (jnp.asarray(w_t, compute_dtype), jnp.asarray(b, jnp.float32).reshape(1, -1))
        )
    return prepared


def policy_network_forward(x, prepared_params, *, block_b=None):
    """x: [B, obs_dim]; prepared_params from prepare_policy_params() -> [B, act_dim]."""
    B, d_in = x.shape
    act_dim = prepared_params[-1][0].shape[1]

    # ---- batch tile selection -----------------------------------------------------
    # Small B: one grid step, no wasted padded rows, no extra ~0.35us step overhead.
    # Mid B:  >=2 "parallel" steps so v7x's two TensorCores both get work.
    # Large B: 512-row tiles (measured ~85% of HBM roofline vs ~29% at 128).
    if block_b is None:
        if B <= 256:
            block_b = _round_up(max(B, 8), 8)
        elif B <= 2048:
            block_b = _round_up(-(-B // 2), 8)
        else:
            block_b = 512
    bp = _round_up(B, block_b)
    x_p = x if bp == B else jnp.pad(x, ((0, bp - B), (0, 0)))

    grid = (bp // block_b,)
    out_shape = jax.ShapeDtypeStruct((bp, act_dim), x.dtype)
    out_specs = pl.BlockSpec((block_b, act_dim), lambda i: (i, 0))

    # ---- advisory cost hint ---------------------------------------------------------
    flops = sum(2 * bp * w.shape[0] * w.shape[1] for w, _ in prepared_params)
    bytes_accessed = (
        x_p.size * x_p.dtype.itemsize
        + bp * act_dim * x.dtype.itemsize
        + sum(w.size * w.dtype.itemsize + b.size * b.dtype.itemsize
              for w, b in prepared_params)
    )
    cost = pl.CostEstimate(
        flops=flops, transcendentals=bp * act_dim, bytes_accessed=bytes_accessed
    )

    flat_wb = [arr for wb in prepared_params for arr in wb]

    def build(weight_pipeline_mode):
        in_specs = [pl.BlockSpec((block_b, d_in), lambda i: (i, 0))]
        for w, b in prepared_params:
            if weight_pipeline_mode is None:
                in_specs.append(pl.BlockSpec(w.shape, lambda i: (0, 0)))
                in_specs.append(pl.BlockSpec(b.shape, lambda i: (0, 0)))
            else:
                in_specs.append(
                    pl.BlockSpec(w.shape, lambda i: (0, 0),
                                 pipeline_mode=weight_pipeline_mode)
                )
                in_specs.append(
                    pl.BlockSpec(b.shape, lambda i: (0, 0),
                                 pipeline_mode=weight_pipeline_mode)
                )
        return pl.pallas_call(
            _fused_mlp_kernel,
            out_shape=out_shape,
            grid=grid,
            in_specs=in_specs,
            out_specs=out_specs,
            compiler_params=pltpu.CompilerParams(dimension_semantics=("parallel",)),
            cost_estimate=cost,
        )

    # Weights/biases have a constant index_map -> one VMEM buffer is enough.
    # Gracefully fall back to default double-buffering if Buffered(1) is rejected.
    try:
        out_p = build(pl.Buffered(buffer_count=1))(x_p, *flat_wb)
    except Exception:
        out_p = build(None)(x_p, *flat_wb)

    return out_p[:B] if bp != B else out_p


def init_policy_params(key, obs_one_dim, act_one_dim, hidden_layers_size):
    """Deterministic init mimicking PyTorch nn.Linear default (U[-1/sqrt(fan_in), +1/sqrt(fan_in)]).

    Weights are stored already transposed: W_t has shape [fan_in, fan_out].
    """
    params = []
    size_in = obs_one_dim
    dims = list(hidden_layers_size) + [act_one_dim]
    for size_out in dims:
        key, kw, kb = jax.random.split(key, 3)
        bound = 1.0 / math.sqrt(size_in)
        w_t = jax.random.uniform(kw, (size_in, size_out), jnp.float32, -bound, bound)
        b = jax.random.uniform(kb, (size_out,), jnp.float32, -bound, bound)
        params.append((w_t, b))
        size_in = size_out
    return params


def policy_network_reference(x, params):
    """Pure-JAX reference for correctness check."""
    n = len(params)
    for i, (w_t, b) in enumerate(params):
        x = x @ w_t + b
        x = jax.nn.sigmoid(x) if i == n - 1 else jnp.maximum(x, 0.0)
    return x


if __name__ == "__main__":
    obs_one_dim = 16
    act_one_dim = 8
    hidden_layers_size = [32, 32]
    batch = 200  # not a power of two -> exercises the block_b = round_up(B, 8) path

    key = jax.random.PRNGKey(0)
    key, kx = jax.random.split(key)
    x = jax.random.normal(kx, (batch, obs_one_dim), jnp.float32)

    params = init_policy_params(key, obs_one_dim, act_one_dim, hidden_layers_size)
    prepared = prepare_policy_params(params)  # one-time prep, off the hot path
    # On v6e/v7x: prepared = prepare_policy_params(params, compute_dtype=jnp.bfloat16)
    # (needs a looser tolerance than the 1e-5 check below).

    out = policy_network_forward(x, prepared)
    out = jax.block_until_ready(out)

    ref = policy_network_reference(x, params)
    assert out.shape == (batch, act_one_dim)
    assert jnp.allclose(out, ref, atol=1e-5, rtol=1e-5)

    print("KERNEL_OK")
</pallas_src>

<mosaic_0001>
module attributes {stable_mosaic.version = 11 : i64} {
  func.func @_fused_mlp_kernel(%arg0: i32, %arg1: memref<200x16xf32, #tpu.memory_space<vmem>>, %arg2: memref<16x32xf32, #tpu.memory_space<vmem>>, %arg3: memref<1x32xf32, #tpu.memory_space<vmem>>, %arg4: memref<32x32xf32, #tpu.memory_space<vmem>>, %arg5: memref<1x32xf32, #tpu.memory_space<vmem>>, %arg6: memref<32x8xf32, #tpu.memory_space<vmem>>, %arg7: memref<1x8xf32, #tpu.memory_space<vmem>>, %arg8: memref<200x8xf32, #tpu.memory_space<vmem>>) attributes {dimension_semantics = [#tpu.dimension_semantics<parallel>], iteration_bounds = array<i64: 1>, scalar_prefetch = 0 : i64, scratch_operands = 0 : i64, tpu.core_type = #tpu.core_type<tc>, window_params = [{transform_indices = @transform_0, window_bounds = array<i64: 200, 16>}, {pipeline_mode = #tpu.pipeline_mode<synchronous>, transform_indices = @transform_1, window_bounds = array<i64: 16, 32>}, {pipeline_mode = #tpu.pipeline_mode<synchronous>, transform_indices = @transform_2, window_bounds = array<i64: 1, 32>}, {pipeline_mode = #tpu.pipeline_mode<synchronous>, transform_indices = @transform_3, window_bounds = array<i64: 32, 32>}, {pipeline_mode = #tpu.pipeline_mode<synchronous>, transform_indices = @transform_4, window_bounds = array<i64: 1, 32>}, {pipeline_mode = #tpu.pipeline_mode<synchronous>, transform_indices = @transform_5, window_bounds = array<i64: 32, 8>}, {pipeline_mode = #tpu.pipeline_mode<synchronous>, transform_indices = @transform_6, window_bounds = array<i64: 1, 8>}, {transform_indices = @transform_7, window_bounds = array<i64: 200, 8>}]} {
    %c0 = arith.constant 0 : index
    %c0_0 = arith.constant 0 : index
    %0 = vector.load %arg1[%c0, %c0_0] : memref<200x16xf32, #tpu.memory_space<vmem>>, vector<200x16xf32>
    %c0_1 = arith.constant 0 : index
    %c0_2 = arith.constant 0 : index
    %1 = vector.load %arg2[%c0_1, %c0_2] : memref<16x32xf32, #tpu.memory_space<vmem>>, vector<16x32xf32>
    %c0_3 = arith.constant 0 : index
    %c0_4 = arith.constant 0 : index
    %2 = vector.load %arg3[%c0_3, %c0_4] : memref<1x32xf32, #tpu.memory_space<vmem>>, vector<1x32xf32>
    %cst = arith.constant dense<0.000000e+00> : vector<200x32xf32>
    %3 = tpu.matmul %0, %1, %cst {dimension_numbers = #tpu.dot_dimension_numbers<[1], [0], [0], [1], [0, 0, 1, 1], [], []>} : vector<200x16xf32>, vector<16x32xf32>, vector<200x32xf32> -> vector<200x32xf32>
    %4 = vector.broadcast %2 : vector<1x32xf32> to vector<200x32xf32>
    %5 = arith.addf %3, %4 : vector<200x32xf32>
    %cst_5 = arith.constant 0.000000e+00 : f32
    %6 = vector.broadcast %cst_5 : f32 to vector<200x32xf32>
    %7 = arith.maximumf %5, %6 : vector<200x32xf32>
    %c0_6 = arith.constant 0 : index
    %c0_7 = arith.constant 0 : index
    %8 = vector.load %arg4[%c0_6, %c0_7] : memref<32x32xf32, #tpu.memory_space<vmem>>, vector<32x32xf32>
    %c0_8 = arith.constant 0 : index
    %c0_9 = arith.constant 0 : index
    %9 = vector.load %arg5[%c0_8, %c0_9] : memref<1x32xf32, #tpu.memory_space<vmem>>, vector<1x32xf32>
    %cst_10 = arith.constant dense<0.000000e+00> : vector<200x32xf32>
    %10 = tpu.matmul %7, %8, %cst_10 {dimension_numbers = #tpu.dot_dimension_numbers<[1], [0], [0], [1], [0, 0, 1, 1], [], []>} : vector<200x32xf32>, vector<32x32xf32>, vector<200x32xf32> -> vector<200x32xf32>
    %11 = vector.broadcast %9 : vector<1x32xf32> to vector<200x32xf32>
    %12 = arith.addf %10, %11 : vector<200x32xf32>
    %cst_11 = arith.constant 0.000000e+00 : f32
    %13 = vector.broadcast %cst_11 : f32 to vector<200x32xf32>
    %14 = arith.maximumf %12, %13 : vector<200x32xf32>
    %c0_12 = arith.constant 0 : index
    %c0_13 = arith.constant 0 : index
    %15 = vector.load %arg6[%c0_12, %c0_13] : memref<32x8xf32, #tpu.memory_space<vmem>>, vector<32x8xf32>
    %c0_14 = arith.constant 0 : index
    %c0_15 = arith.constant 0 : index
    %16 = vector.load %arg7[%c0_14, %c0_15] : memref<1x8xf32, #tpu.memory_space<vmem>>, vector<1x8xf32>
    %cst_16 = arith.constant dense<0.000000e+00> : vector<200x8xf32>
    %17 = tpu.matmul %14, %15, %cst_16 {dimension_numbers = #tpu.dot_dimension_numbers<[1], [0], [0], [1], [0, 0, 1, 1], [], []>} : vector<200x32xf32>, vector<32x8xf32>, vector<200x8xf32> -> vector<200x8xf32>
    %18 = vector.broadcast %16 : vector<1x8xf32> to vector<200x8xf32>
    %19 = arith.addf %17, %18 : vector<200x8xf32>
    %20 = arith.negf %19 : vector<200x8xf32>
    %21 = math.exp %20 : vector<200x8xf32>
    %cst_17 = arith.constant 1.000000e+00 : f32
    %22 = vector.broadcast %cst_17 : f32 to vector<200x8xf32>
    %23 = arith.addf %22, %21 : vector<200x8xf32>
    %24 = arith.divf %22, %23 : vector<200x8xf32>
    %c0_18 = arith.constant 0 : index
    %c0_19 = arith.constant 0 : index
    %25 = vector.load %arg8[%c0_18, %c0_19] : memref<200x8xf32, #tpu.memory_space<vmem>>, vector<200x8xf32>
    tpu.vector_store %arg8[%c0_18, %c0_19], %24 {strides = array<i32>} : memref<200x8xf32, #tpu.memory_space<vmem>>, vector<200x8xf32>,
    return
  }
  func.func @transform_0(%arg0: i32) -> (i32, i32) {
    %c0_i32 = arith.constant 0 : i32
    %c0_i32_0 = arith.constant 0 : i32
    return %arg0, %c0_i32 : i32, i32
  }
  func.func @transform_1(%arg0: i32) -> (i32, i32) {
    %c0_i32 = arith.constant 0 : i32
    %c0_i32_0 = arith.constant 0 : i32
    %c0_i32_1 = arith.constant 0 : i32
    return %c0_i32, %c0_i32_0 : i32, i32
  }
  func.func @transform_2(%arg0: i32) -> (i32, i32) {
    %c0_i32 = arith.constant 0 : i32
    %c0_i32_0 = arith.constant 0 : i32
    %c0_i32_1 = arith.constant 0 : i32
    return %c0_i32, %c0_i32_0 : i32, i32
  }
  func.func @transform_3(%arg0: i32) -> (i32, i32) {
    %c0_i32 = arith.constant 0 : i32
    %c0_i32_0 = arith.constant 0 : i32
    %c0_i32_1 = arith.constant 0 : i32
    return %c0_i32, %c0_i32_0 : i32, i32
  }
  func.func @transform_4(%arg0: i32) -> (i32, i32) {
    %c0_i32 = arith.constant 0 : i32
    %c0_i32_0 = arith.constant 0 : i32
    %c0_i32_1 = arith.constant 0 : i32
    return %c0_i32, %c0_i32_0 : i32, i32
  }
  func.func @transform_5(%arg0: i32) -> (i32, i32) {
    %c0_i32 = arith.constant 0 : i32
    %c0_i32_0 = arith.constant 0 : i32
    %c0_i32_1 = arith.constant 0 : i32
    return %c0_i32, %c0_i32_0 : i32, i32
  }
  func.func @transform_6(%arg0: i32) -> (i32, i32) {
    %c0_i32 = arith.constant 0 : i32
    %c0_i32_0 = arith.constant 0 : i32
    %c0_i32_1 = arith.constant 0 : i32
    return %c0_i32, %c0_i32_0 : i32, i32
  }
  func.func @transform_7(%arg0: i32) -> (i32, i32) {
    %c0_i32 = arith.constant 0 : i32
    %c0_i32_0 = arith.constant 0 : i32
    return %arg0, %c0_i32 : i32, i32
  }
}

module attributes {stable_mosaic.version = 11 : i64} {
  func.func @_fused_mlp_kernel(%arg0: i32, %arg1: memref<200x16xf32, #tpu.memory_space<vmem>>, %arg2: memref<16x32xf32, #tpu.memory_space<vmem>>, %arg3: memref<1x32xf32, #tpu.memory_space<vmem>>, %arg4: memref<32x32xf32, #tpu.memory_space<vmem>>, %arg5: memref<1x32xf32, #tpu.memory_space<vmem>>, %arg6: memref<32x8xf32, #tpu.memory_space<vmem>>, %arg7: memref<1x8xf32, #tpu.memory_space<vmem>>, %arg8: memref<200x8xf32, #tpu.memory_space<vmem>>) attributes {dimension_semantics = [#tpu.dimension_semantics<parallel>], iteration_bounds = array<i64: 1>, scalar_prefetch = 0 : i64, scratch_operands = 0 : i64, tpu.core_type = #tpu.core_type<tc>, window_params = [{transform_indices = @transform_0, window_bounds = array<i64: 200, 16>}, {pipeline_mode = #tpu.pipeline_mode<synchronous>, transform_indices = @transform_1, window_bounds = array<i64: 16, 32>}, {pipeline_mode = #tpu.pipeline_mode<synchronous>, transform_indices = @transform_2, window_bounds = array<i64: 1, 32>}, {pipeline_mode = #tpu.pipeline_mode<synchronous>, transform_indices = @transform_3, window_bounds = array<i64: 32, 32>}, {pipeline_mode = #tpu.pipeline_mode<synchronous>, transform_indices = @transform_4, window_bounds = array<i64: 1, 32>}, {pipeline_mode = #tpu.pipeline_mode<synchronous>, transform_indices = @transform_5, window_bounds = array<i64: 32, 8>}, {pipeline_mode = #tpu.pipeline_mode<synchronous>, transform_indices = @transform_6, window_bounds = array<i64: 1, 8>}, {transform_indices = @transform_7, window_bounds = array<i64: 200, 8>}]} {
    %c0 = arith.constant 0 : index
    %c0_0 = arith.constant 0 : index
    %0 = vector.load %arg1[%c0, %c0_0] : memref<200x16xf32, #tpu.memory_space<vmem>>, vector<200x16xf32>
    %c0_1 = arith.constant 0 : index
    %c0_2 = arith.constant 0 : index
    %1 = vector.load %arg2[%c0_1, %c0_2] : memref<16x32xf32, #tpu.memory_space<vmem>>, vector<16x32xf32>
    %c0_3 = arith.constant 0 : index
    %c0_4 = arith.constant 0 : index
    %2 = vector.load %arg3[%c0_3, %c0_4] : memref<1x32xf32, #tpu.memory_space<vmem>>, vector<1x32xf32>
    %cst = arith.constant dense<0.000000e+00> : vector<200x32xf32>
    %3 = tpu.matmul %0, %1, %cst {dimension_numbers = #tpu.dot_dimension_numbers<[1], [0], [0], [1], [0, 0, 1, 1], [], []>} : vector<200x16xf32>, vector<16x32xf32>, vector<200x32xf32> -> vector<200x32xf32>
    %4 = vector.broadcast %2 : vector<1x32xf32> to vector<200x32xf32>
    %5 = arith.addf %3, %4 : vector<200x32xf32>
    %cst_5 = arith.constant 0.000000e+00 : f32
    %6 = vector.broadcast %cst_5 : f32 to vector<200x32xf32>
    %7 = arith.maximumf %5, %6 : vector<200x32xf32>
    %c0_6 = arith.constant 0 : index
    %c0_7 = arith.constant 0 : index
    %8 = vector.load %arg4[%c0_6, %c0_7] : memref<32x32xf32, #tpu.memory_space<vmem>>, vector<32x32xf32>
    %c0_8 = arith.constant 0 : index
    %c0_9 = arith.constant 0 : index
    %9 = vector.load %arg5[%c0_8, %c0_9] : memref<1x32xf32, #tpu.memory_space<vmem>>, vector<1x32xf32>
    %cst_10 = arith.constant dense<0.000000e+00> : vector<200x32xf32>
    %10 = tpu.matmul %7, %8, %cst_10 {dimension_numbers = #tpu.dot_dimension_numbers<[1], [0], [0], [1], [0, 0, 1, 1], [], []>} : vector<200x32xf32>, vector<32x32xf32>, vector<200x32xf32> -> vector<200x32xf32>
    %11 = vector.broadcast %9 : vector<1x32xf32> to vector<200x32xf32>
    %12 = arith.addf %10, %11 : vector<200x32xf32>
    %cst_11 = arith.constant 0.000000e+00 : f32
    %13 = vector.broadcast %cst_11 : f32 to vector<200x32xf32>
    %14 = arith.maximumf %12, %13 : vector<200x32xf32>
    %c0_12 = arith.constant 0 : index
    %c0_13 = arith.constant 0 : index
    %15 = vector.load %arg6[%c0_12, %c0_13] : memref<32x8xf32, #tpu.memory_space<vmem>>, vector<32x8xf32>
    %c0_14 = arith.constant 0 : index
    %c0_15 = arith.constant 0 : index
    %16 = vector.load %arg7[%c0_14, %c0_15] : memref<1x8xf32, #tpu.memory_space<vmem>>, vector<1x8xf32>
    %cst_16 = arith.constant dense<0.000000e+00> : vector<200x8xf32>
    %17 = tpu.matmul %14, %15, %cst_16 {dimension_numbers = #tpu.dot_dimension_numbers<[1], [0], [0], [1], [0, 0, 1, 1], [], []>} : vector<200x32xf32>, vector<32x8xf32>, vector<200x8xf32> -> vector<200x8xf32>
    %18 = vector.broadcast %16 : vector<1x8xf32> to vector<200x8xf32>
    %19 = arith.addf %17, %18 : vector<200x8xf32>
    %20 = arith.negf %19 : vector<200x8xf32>
    %21 = math.exp %20 : vector<200x8xf32>
    %cst_17 = arith.constant 1.000000e+00 : f32
    %22 = vector.broadcast %cst_17 : f32 to vector<200x8xf32>
    %23 = arith.addf %22, %21 : vector<200x8xf32>
    %24 = arith.divf %22, %23 : vector<200x8xf32>
    %c0_18 = arith.constant 0 : index
    %c0_19 = arith.constant 0 : index
    %25 = vector.load %arg8[%c0_18, %c0_19] : memref<200x8xf32, #tpu.memory_space<vmem>>, vector<200x8xf32>
    tpu.vector_store %arg8[%c0_18, %c0_19], %24 {strides = array<i32>} : memref<200x8xf32, #tpu.memory_space<vmem>>, vector<200x8xf32>,
    return
  }
  func.func @transform_0(%arg0: i32) -> (i32, i32) {
    %c0_i32 = arith.constant 0 : i32
    %c0_i32_0 = arith.constant 0 : i32
    return %arg0, %c0_i32 : i32, i32
  }
  func.func @transform_1(%arg0: i32) -> (i32, i32) {
    %c0_i32 = arith.constant 0 : i32
    %c0_i32_0 = arith.constant 0 : i32
    %c0_i32_1 = arith.constant 0 : i32
    return %c0_i32, %c0_i32_0 : i32, i32
  }
  func.func @transform_2(%arg0: i32) -> (i32, i32) {
    %c0_i32 = arith.constant 0 : i32
    %c0_i32_0 = arith.constant 0 : i32
    %c0_i32_1 = arith.constant 0 : i32
    return %c0_i32, %c0_i32_0 : i32, i32
  }
  func.func @transform_3(%arg0: i32) -> (i32, i32) {
    %c0_i32 = arith.constant 0 : i32
    %c0_i32_0 = arith.constant 0 : i32
    %c0_i32_1 = arith.constant 0 : i32
    return %c0_i32, %c0_i32_0 : i32, i32
  }
  func.func @transform_4(%arg0: i32) -> (i32, i32) {
    %c0_i32 = arith.constant 0 : i32
    %c0_i32_0 = arith.constant 0 : i32
    %c0_i32_1 = arith.constant 0 : i32
    return %c0_i32, %c0_i32_0 : i32, i32
  }
  func.func @transform_5(%arg0: i32) -> (i32, i32) {
    %c0_i32 = arith.constant 0 : i32
    %c0_i32_0 = arith.constant 0 : i32
    %c0_i32_1 = arith.constant 0 : i32
    return %c0_i32, %c0_i32_0 : i32, i32
  }
  func.func @transform_6(%arg0: i32) -> (i32, i32) {
    %c0_i32 = arith.constant 0 : i32
    %c0_i32_0 = arith.constant 0 : i32
    %c0_i32_1 = arith.constant 0 : i32
    return %c0_i32, %c0_i32_0 : i32, i32
  }
  func.func @transform_7(%arg0: i32) -> (i32, i32) {
    %c0_i32 = arith.constant 0 : i32
    %c0_i32_0 = arith.constant 0 : i32
    return %arg0, %c0_i32 : i32, i32
  }
}

</mosaic_0001>

<llo_original>
// kernel: tpu_custom_call.1
$region0: #{tpu_custom_call.1}
  #allocation0 [shape = 'u32[]', space=smem, size = 0x4, offset = 0x4, fixed_abs, tag = 'smem constant byte address 0x4 - core index']
  #allocation1 [shape = 'u32[144,128]{1,0:T(1,128)}', space=vmem, size = 0x12000, scoped, tag = 'internal scratch']
  %s0 = inlined_call_operand.vmem [shape: f32[200,16], index: 0, kind: input, shape index: {}]
  %s1 = inlined_call_operand.vmem [shape: f32[16,32], index: 1, kind: input, shape index: {}]
  %s2 = inlined_call_operand.vmem [shape: f32[1,32], index: 2, kind: input, shape index: {}]
  %s3 = inlined_call_operand.vmem [shape: f32[32,32], index: 3, kind: input, shape index: {}]
  %s4 = inlined_call_operand.vmem [shape: f32[1,32], index: 4, kind: input, shape index: {}]
  %s5 = inlined_call_operand.vmem [shape: f32[32,8], index: 5, kind: input, shape index: {}]
  %s6 = inlined_call_operand.vmem [shape: f32[1,8], index: 6, kind: input, shape index: {}]
  %s7 = inlined_call_operand.vmem [shape: f32[200,8], index: 7, kind: output, shape index: {}]
  %s8 = sld [smem:[#allocation0]]
  $region38: #{tpu_custom_call.1} parent=0
    _
  %s10 = ssub.s32 1, %s8
  %s11 = scalar_select 0, %s10, %s8
  // Predicated region
  $region2: #{tpu_custom_call.1} parent=0 // pred_check
    _
  $region3: #{tpu_custom_call.1} parent=0 // pred_check_branch
    %13 = sbr.rel (0) target = $region5
  $region4: #{tpu_custom_call.1} parent=0 // pred_region
    _
  $region5: #{tpu_custom_call.1} parent=0 // pred_fallthru
    _
  // Predicated region
  $region6: #{tpu_custom_call.1} parent=0 // pred_check
    _
  $region7: #{tpu_custom_call.1} parent=0 // pred_check_branch
    %15 = sbr.rel (0) target = $region9
  $region8: #{tpu_custom_call.1} parent=0 // pred_region
    _
  $region9: #{tpu_custom_call.1} parent=0 // pred_fallthru
    _
  // Predicated region
  $region10: #{tpu_custom_call.1} parent=0 // pred_check
    _
  $region11: #{tpu_custom_call.1} parent=0 // pred_check_branch
    %17 = sbr.rel (0) target = $region13
  $region12: #{tpu_custom_call.1} parent=0 // pred_region
    _
  $region13: #{tpu_custom_call.1} parent=0 // pred_fallthru
    _
  // Predicated region
  $region14: #{tpu_custom_call.1} parent=0 // pred_check
    _
  $region15: #{tpu_custom_call.1} parent=0 // pred_check_branch
    %19 = sbr.rel (0) target = $region17
  $region16: #{tpu_custom_call.1} parent=0 // pred_region
    _
  $region17: #{tpu_custom_call.1} parent=0 // pred_fallthru
    _
  // Predicated region
  $region18: #{tpu_custom_call.1} parent=0 // pred_check
    _
  $region19: #{tpu_custom_call.1} parent=0 // pred_check_branch
    %21 = sbr.rel (0) target = $region21
  $region20: #{tpu_custom_call.1} parent=0 // pred_region
    _
  $region21: #{tpu_custom_call.1} parent=0 // pred_fallthru
    _
  // Predicated region
  $region22: #{tpu_custom_call.1} parent=0 // pred_check
    _
  $region23: #{tpu_custom_call.1} parent=0 // pred_check_branch
    %23 = sbr.rel (0) target = $region25
  $region24: #{tpu_custom_call.1} parent=0 // pred_region
    _
  $region25: #{tpu_custom_call.1} parent=0 // pred_fallthru
    _
  // Predicated region
  $region26: #{tpu_custom_call.1} parent=0 // pred_check
    _
  $region27: #{tpu_custom_call.1} parent=0 // pred_check_branch
    %25 = sbr.rel (0) target = $region29
  $region28: #{tpu_custom_call.1} parent=0 // pred_region
    _
  $region29: #{tpu_custom_call.1} parent=0 // pred_fallthru
    _
  %v26 = vld [vmem:[%s0] sm:$0xff]
  %v27 = vld [vmem:[%s0 + $0x8] sm:$0xff]
  %v28 = vld [vmem:[%s0 + $0x10] sm:$0xff]
  %v29 = vld [vmem:[%s0 + $0x18] sm:$0xff]
  %v30 = vld [vmem:[%s0 + $0x20] sm:$0xff]
  %v31 = vld [vmem:[%s0 + $0x28] sm:$0xff]
  %v32 = vld [vmem:[%s0 + $0x30] sm:$0xff]
  %v33 = vld [vmem:[%s0 + $0x38] sm:$0xff]
  %v34 = vld [vmem:[%s0 + $0x40] sm:$0xff]
  %v35 = vld [vmem:[%s0 + $0x48] sm:$0xff]
  %v36 = vld [vmem:[%s0 + $0x50] sm:$0xff]
  %v37 = vld [vmem:[%s0 + $0x58] sm:$0xff]
  %v38 = vld [vmem:[%s0 + $0x60] sm:$0xff]
  %v39 = vld [vmem:[%s0 + $0x68] sm:$0xff]
  %v40 = vld [vmem:[%s0 + $0x70] sm:$0xff]
  %v41 = vld [vmem:[%s0 + $0x78] sm:$0xff]
  %v42 = vld [vmem:[%s0 + $0x80] sm:$0xff]
  %v43 = vld [vmem:[%s0 + $0x88] sm:$0xff]
  %v44 = vld [vmem:[%s0 + $0x90] sm:$0xff]
  %v45 = vld [vmem:[%s0 + $0x98] sm:$0xff]
  %v46 = vld [vmem:[%s0 + $0xa0] sm:$0xff]
  %v47 = vld [vmem:[%s0 + $0xa8] sm:$0xff]
  %v48 = vld [vmem:[%s0 + $0xb0] sm:$0xff]
  %v49 = vld [vmem:[%s0 + $0xb8] sm:$0xff]
  %v50 = vld [vmem:[%s0 + $0xc0] sm:$0xff]
  %v51 = vld [vmem:[%s1] sm:$0xff]
  %v52 = vld [vmem:[%s1 + $0x8] sm:$0xff]
  %v53 = vld [vmem:[%s2] sm:$0x1]
  %v55 = vlaneseq
  %v56 = vshrl.u32 %v55, 7
  %v57 = vsub.s32 0, %v56
  %v58 = vrot.slane %v53, %v57
  %vm60 = vcmask 130048
  %v62 = vsel %vm60, %v26, 0
  %v65 = vsel %vm60, %v27, 0
  %v68 = vsel %vm60, %v28, 0
  %v71 = vsel %vm60, %v29, 0
  %v74 = vsel %vm60, %v30, 0
  %v77 = vsel %vm60, %v31, 0
  %v80 = vsel %vm60, %v32, 0
  %v83 = vsel %vm60, %v33, 0
  %v86 = vsel %vm60, %v34, 0
  %v89 = vsel %vm60, %v35, 0
  %v92 = vsel %vm60, %v36, 0
  %v95 = vsel %vm60, %v37, 0
  %v98 = vsel %vm60, %v38, 0
  %v101 = vsel %vm60, %v39, 0
  %v104 = vsel %vm60, %v40, 0
  %v107 = vsel %vm60, %v41, 0
  %v110 = vsel %vm60, %v42, 0
  %v113 = vsel %vm60, %v43, 0
  %v116 = vsel %vm60, %v44, 0
  %v119 = vsel %vm60, %v45, 0
  %v122 = vsel %vm60, %v46, 0
  %v125 = vsel %vm60, %v47, 0
  %v128 = vsel %vm60, %v48, 0
  %v131 = vsel %vm60, %v49, 0
  %v134 = vsel %vm60, %v50, 0
  %136 = vmatprep.subr.mxu0 0.0
  %137 = vmatpush1.msra.mxu0 %v51
  %138 = vmatprep.subr.mxu0 0.0
  %139 = vmatpush1.msra.mxu0 %v52
  %140 = vmatprep.subr.mxu0 0.0
  %141 = vmatpush1.msra.mxu0 0.0
  %142 = vmatprep.subr.mxu0 0.0
  %143 = vmatpush1.msra.mxu0 0.0
  %144 = vmatprep.subr.mxu0 0.0
  %145 = vmatpush1.msra.mxu0 0.0
  %146 = vmatprep.subr.mxu0 0.0
  %147 = vmatpush1.msra.mxu0 0.0
  %148 = vmatprep.subr.mxu0 0.0
  %149 = vmatpush1.msra.mxu0 0.0
  %150 = vmatprep.subr.mxu0 0.0
  %151 = vmatpush1.msra.mxu0 0.0
  %152 = vmatprep.subr.mxu0 0.0
  %153 = vmatpush1.msra.mxu0 0.0
  %154 = vmatprep.subr.mxu0 0.0
  %155 = vmatpush1.msra.mxu0 0.0
  %156 = vmatprep.subr.mxu0 0.0
  %157 = vmatpush1.msra.mxu0 0.0
  %158 = vmatprep.subr.mxu0 0.0
  %159 = vmatpush1.msra.mxu0 0.0
  %160 = vmatprep.subr.mxu0 0.0
  %161 = vmatpush1.msra.mxu0 0.0
  %162 = vmatprep.subr.mxu0 0.0
  %163 = vmatpush1.msra.mxu0 0.0
  %164 = vmatprep.subr.mxu0 0.0
  %165 = vmatpush1.msra.mxu0 0.0
  %166 = vmatprep.subr.mxu0 0.0
  %167 = vmatpush1.msra.mxu0 0.0
  %168 = vmatprep.subr.mxu0 0.0
  %169 = vmatpush1.msra.mxu0 0.0
  %170 = vmatprep.subr.mxu0 0.0
  %171 = vmatpush1.msra.mxu0 0.0
  %172 = vmatprep.subr.mxu0 0.0
  %173 = vmatpush1.msra.mxu0 0.0
  %174 = vmatprep.subr.mxu0 0.0
  %175 = vmatpush1.msra.mxu0 0.0
  %176 = vmatprep.subr.mxu0 0.0
  %177 = vmatpush1.msra.mxu0 0.0
  %178 = vmatprep.subr.mxu0 0.0
  %179 = vmatpush1.msra.mxu0 0.0
  %180 = vmatprep.subr.mxu0 0.0
  %181 = vmatpush1.msra.mxu0 0.0
  %182 = vmatprep.subr.mxu0 0.0
  %183 = vmatpush1.msra.mxu0 0.0
  %184 = vmatprep.subr.mxu0 0.0
  %185 = vmatpush1.msra.mxu0 0.0
  %186 = vmatprep.subr.mxu0 0.0
  %187 = vmatpush1.msra.mxu0 0.0
  %188 = vmatprep.subr.mxu0 0.0
  %189 = vmatpush1.msra.mxu0 0.0
  %190 = vmatprep.subr.mxu0 0.0
  %191 = vmatpush1.msra.mxu0 0.0
  %192 = vmatprep.subr.mxu0 0.0
  %193 = vmatpush1.msra.mxu0 0.0
  %194 = vmatprep.subr.mxu0 0.0
  %195 = vmatpush1.msra.mxu0 0.0
  %196 = vmatprep.subr.mxu0 0.0
  %197 = vmatpush1.msra.mxu0 0.0
  %198 = vmatprep.subr.mxu0 0.0
  %199 = vmatpush1.msra.mxu0 0.0
  %200 = vmatprep.mubr.f32.mxu0 0.0
  %201 = vmatmul.mubr.f32.gmra.mrb[0].mxu0 %v62
  %v202 = vpop.f32.mrb[0].mxu0
  %v203 = vadd.f32 %v58, %v202
  %v204 = vpop.f32.mrb[0].mxu0
  %205 = vmatprep.mubr.f32.mxu0 0.0
  %206 = vmatmul.mubr.f32.gmra.mrb[0].mxu0 %v65
  %v207 = vpop.f32.mrb[0].mxu0
  %v208 = vadd.f32 %v58, %v207
  %v209 = vpop.f32.mrb[0].mxu0
  %210 = vmatprep.mubr.f32.mxu0 0.0
  %211 = vmatmul.mubr.f32.gmra.mrb[0].mxu0 %v68
  %v212 = vpop.f32.mrb[0].mxu0
  %v213 = vadd.f32 %v58, %v212
  %v214 = vpop.f32.mrb[0].mxu0
  %215 = vmatprep.mubr.f32.mxu0 0.0
  %216 = vmatmul.mubr.f32.gmra.mrb[0].mxu0 %v71
  %v217 = vpop.f32.mrb[0].mxu0
  %v218 = vadd.f32 %v58, %v217
  %v219 = vpop.f32.mrb[0].mxu0
  %220 = vmatprep.mubr.f32.mxu0 0.0
  %221 = vmatmul.mubr.f32.gmra.mrb[0].mxu0 %v74
  %v222 = vpop.f32.mrb[0].mxu0
  %v223 = vadd.f32 %v58, %v222
  %v224 = vpop.f32.mrb[0].mxu0
  %225 = vmatprep.mubr.f32.mxu0 0.0
  %226 = vmatmul.mubr.f32.gmra.mrb[0].mxu0 %v77
  %v227 = vpop.f32.mrb[0].mxu0
  %v228 = vadd.f32 %v58, %v227
  %v229 = vpop.f32.mrb[0].mxu0
  %230 = vmatprep.mubr.f32.mxu0 0.0
  %231 = vmatmul.mubr.f32.gmra.mrb[0].mxu0 %v80
  %v232 = vpop.f32.mrb[0].mxu0
  %v233 = vadd.f32 %v58, %v232
  %v234 = vpop.f32.mrb[0].mxu0
  %235 = vmatprep.mubr.f32.mxu0 0.0
  %236 = vmatmul.mubr.f32.gmra.mrb[0].mxu0 %v83
  %v237 = vpop.f32.mrb[0].mxu0
  %v238 = vadd.f32 %v58, %v237
  %v239 = vpop.f32.mrb[0].mxu0
  %240 = vmatprep.mubr.f32.mxu0 0.0
  %241 = vmatmul.mubr.f32.gmra.mrb[0].mxu0 %v86
  %v242 = vpop.f32.mrb[0].mxu0
  %v243 = vadd.f32 %v58, %v242
  %v244 = vpop.f32.mrb[0].mxu0
  %245 = vmatprep.mubr.f32.mxu0 0.0
  %246 = vmatmul.mubr.f32.gmra.mrb[0].mxu0 %v89
  %v247 = vpop.f32.mrb[0].mxu0
  %v248 = vadd.f32 %v58, %v247
  %v249 = vpop.f32.mrb[0].mxu0
  %250 = vmatprep.mubr.f32.mxu0 0.0
  %251 = vmatmul.mubr.f32.gmra.mrb[0].mxu0 %v92
  %v252 = vpop.f32.mrb[0].mxu0
  %v253 = vadd.f32 %v58, %v252
  %v254 = vpop.f32.mrb[0].mxu0
  %255 = vmatprep.mubr.f32.mxu0 0.0
  %256 = vmatmul.mubr.f32.gmra.mrb[0].mxu0 %v95
  %v257 = vpop.f32.mrb[0].mxu0
  %v258 = vadd.f32 %v58, %v257
  %v259 = vpop.f32.mrb[0].mxu0
  %260 = vmatprep.mubr.f32.mxu0 0.0
  %261 = vmatmul.mubr.f32.gmra.mrb[0].mxu0 %v98
  %v262 = vpop.f32.mrb[0].mxu0
  %v263 = vadd.f32 %v58, %v262
  %v264 = vpop.f32.mrb[0].mxu0
  %265 = vmatprep.mubr.f32.mxu0 0.0
  %266 = vmatmul.mubr.f32.gmra.mrb[0].mxu0 %v101
  %v267 = vpop.f32.mrb[0].mxu0
  %v268 = vadd.f32 %v58, %v267
  %v269 = vpop.f32.mrb[0].mxu0
  %270 = vmatprep.mubr.f32.mxu0 0.0
  %271 = vmatmul.mubr.f32.gmra.mrb[0].mxu0 %v104
  %v272 = vpop.f32.mrb[0].mxu0
  %v273 = vadd.f32 %v58, %v272
  %v274 = vpop.f32.mrb[0].mxu0
  %275 = vmatprep.mubr.f32.mxu0 0.0
  %276 = vmatmul.mubr.f32.gmra.mrb[0].mxu0 %v107
  %v277 = vpop.f32.mrb[0].mxu0
  %v278 = vadd.f32 %v58, %v277
  %v279 = vpop.f32.mrb[0].mxu0
  %280 = vmatprep.mubr.f32.mxu0 0.0
  %281 = vmatmul.mubr.f32.gmra.mrb[0].mxu0 %v110
  %v282 = vpop.f32.mrb[0].mxu0
  %v283 = vadd.f32 %v58, %v282
  %v284 = vpop.f32.mrb[0].mxu0
  %285 = vmatprep.mubr.f32.mxu0 0.0
  %286 = vmatmul.mubr.f32.gmra.mrb[0].mxu0 %v113
  %v287 = vpop.f32.mrb[0].mxu0
  %v288 = vadd.f32 %v58, %v287
  %v289 = vpop.f32.mrb[0].mxu0
  %290 = vmatprep.mubr.f32.mxu0 0.0
  %291 = vmatmul.mubr.f32.gmra.mrb[0].mxu0 %v116
  %v292 = vpop.f32.mrb[0].mxu0
  %v293 = vadd.f32 %v58, %v292
  %v294 = vpop.f32.mrb[0].mxu0
  %295 = vmatprep.mubr.f32.mxu0 0.0
  %296 = vmatmul.mubr.f32.gmra.mrb[0].mxu0 %v119
  %v297 = vpop.f32.mrb[0].mxu0
  %v298 = vadd.f32 %v58, %v297
  %v299 = vpop.f32.mrb[0].mxu0
  %300 = vmatprep.mubr.f32.mxu0 0.0
  %301 = vmatmul.mubr.f32.gmra.mrb[0].mxu0 %v122
  %v302 = vpop.f32.mrb[0].mxu0
  %v303 = vadd.f32 %v58, %v302
  %v304 = vpop.f32.mrb[0].mxu0
  %305 = vmatprep.mubr.f32.mxu0 0.0
  %306 = vmatmul.mubr.f32.gmra.mrb[0].mxu0 %v125
  %v307 = vpop.f32.mrb[0].mxu0
  %v308 = vadd.f32 %v58, %v307
  %v309 = vpop.f32.mrb[0].mxu0
  %310 = vmatprep.mubr.f32.mxu0 0.0
  %311 = vmatmul.mubr.f32.gmra.mrb[0].mxu0 %v128
  %v312 = vpop.f32.mrb[0].mxu0
  %v313 = vadd.f32 %v58, %v312
  %v314 = vpop.f32.mrb[0].mxu0
  %315 = vmatprep.mubr.f32.mxu0 0.0
  %316 = vmatmul.mubr.f32.gmra.mrb[0].mxu0 %v131
  %v317 = vpop.f32.mrb[0].mxu0
  %v318 = vadd.f32 %v58, %v317
  %v319 = vpop.f32.mrb[0].mxu0
  %320 = vmatprep.mubr.f32.mxu0 0.0
  %321 = vmatmul.mubr.f32.gmra.mrb[0].mxu0 %v134
  %v322 = vpop.f32.mrb[0].mxu0
  %v323 = vadd.f32 %v58, %v322
  %v324 = vpop.f32.mrb[0].mxu0
  %325 = vdwg.mxu0
  %v326 = vmax.f32 %v203, 0.0
  %v327 = vmax.f32 %v208, 0.0
  %v328 = vmax.f32 %v213, 0.0
  %v329 = vmax.f32 %v218, 0.0
  %v330 = vmax.f32 %v223, 0.0
  %v331 = vmax.f32 %v228, 0.0
  %v332 = vmax.f32 %v233, 0.0
  %v333 = vmax.f32 %v238, 0.0
  %v334 = vmax.f32 %v243, 0.0
  %v335 = vmax.f32 %v248, 0.0
  %v336 = vmax.f32 %v253, 0.0
  %v337 = vmax.f32 %v258, 0.0
  %v338 = vmax.f32 %v263, 0.0
  %v339 = vmax.f32 %v268, 0.0
  %v340 = vmax.f32 %v273, 0.0
  %v341 = vmax.f32 %v278, 0.0
  %v342 = vmax.f32 %v283, 0.0
  %v343 = vmax.f32 %v288, 0.0
  %v344 = vmax.f32 %v293, 0.0
  %v345 = vmax.f32 %v298, 0.0
  %v346 = vmax.f32 %v303, 0.0
  %v347 = vmax.f32 %v308, 0.0
  %v348 = vmax.f32 %v313, 0.0
  %v349 = vmax.f32 %v318, 0.0
  %v350 = vmax.f32 %v323, 0.0
  %v351 = vld [vmem:[%s3] sm:$0xff]
  %v352 = vld [vmem:[%s3 + $0x8] sm:$0xff]
  %v353 = vld [vmem:[%s3 + $0x10] sm:$0xff]
  %v354 = vld [vmem:[%s3 + $0x18] sm:$0xff]
  %v355 = vld [vmem:[%s4] sm:$0x1]
  %v357 = vlaneseq
  %v358 = vshrl.u32 %v357, 7
  %v359 = vsub.s32 0, %v358
  %v360 = vrot.slane %v355, %v359
  %vm362 = vcmask 261120
  %v364 = vsel %vm362, %v326, 0
  %v367 = vsel %vm362, %v327, 0
  %v370 = vsel %vm362, %v328, 0
  %v373 = vsel %vm362, %v329, 0
  %v376 = vsel %vm362, %v330, 0
  %v379 = vsel %vm362, %v331, 0
  %v382 = vsel %vm362, %v332, 0
  %v385 = vsel %vm362, %v333, 0
  %v388 = vsel %vm362, %v334, 0
  %v391 = vsel %vm362, %v335, 0
  %v394 = vsel %vm362, %v336, 0
  %v397 = vsel %vm362, %v337, 0
  %v400 = vsel %vm362, %v338, 0
  %v403 = vsel %vm362, %v339, 0
  %v406 = vsel %vm362, %v340, 0
  %v409 = vsel %vm362, %v341, 0
  %v412 = vsel %vm362, %v342, 0
  %v415 = vsel %vm362, %v343, 0
  %v418 = vsel %vm362, %v344, 0
  %v421 = vsel %vm362, %v345, 0
  %v424 = vsel %vm362, %v346, 0
  %v427 = vsel %vm362, %v347, 0
  %v430 = vsel %vm362, %v348, 0
  %v433 = vsel %vm362, %v349, 0
  %v436 = vsel %vm362, %v350, 0
  %438 = vmatprep.subr.mxu0 0.0
  %439 = vmatpush1.msra.mxu0 %v351
  %440 = vmatprep.subr.mxu0 0.0
  %441 = vmatpush1.msra.mxu0 %v352
  %442 = vmatprep.subr.mxu0 0.0
  %443 = vmatpush1.msra.mxu0 %v353
  %444 = vmatprep.subr.mxu0 0.0
  %445 = vmatpush1.msra.mxu0 %v354
  %446 = vmatprep.subr.mxu0 0.0
  %447 = vmatpush1.msra.mxu0 0.0
  %448 = vmatprep.subr.mxu0 0.0
  %449 = vmatpush1.msra.mxu0 0.0
  %450 = vmatprep.subr.mxu0 0.0
  %451 = vmatpush1.msra.mxu0 0.0
  %452 = vmatprep.subr.mxu0 0.0
  %453 = vmatpush1.msra.mxu0 0.0
  %454 = vmatprep.subr.mxu0 0.0
  %455 = vmatpush1.msra.mxu0 0.0
  %456 = vmatprep.subr.mxu0 0.0
  %457 = vmatpush1.msra.mxu0 0.0
  %458 = vmatprep.subr.mxu0 0.0
  %459 = vmatpush1.msra.mxu0 0.0
  %460 = vmatprep.subr.mxu0 0.0
  %461 = vmatpush1.msra.mxu0 0.0
  %462 = vmatprep.subr.mxu0 0.0
  %463 = vmatpush1.msra.mxu0 0.0
  %464 = vmatprep.subr.mxu0 0.0
  %465 = vmatpush1.msra.mxu0 0.0
  %466 = vmatprep.subr.mxu0 0.0
  %467 = vmatpush1.msra.mxu0 0.0
  %468 = vmatprep.subr.mxu0 0.0
  %469 = vmatpush1.msra.mxu0 0.0
  %470 = vmatprep.subr.mxu0 0.0
  %471 = vmatpush1.msra.mxu0 0.0
  %472 = vmatprep.subr.mxu0 0.0
  %473 = vmatpush1.msra.mxu0 0.0
  %474 = vmatprep.subr.mxu0 0.0
  %475 = vmatpush1.msra.mxu0 0.0
  %476 = vmatprep.subr.mxu0 0.0
  %477 = vmatpush1.msra.mxu0 0.0
  %478 = vmatprep.subr.mxu0 0.0
  %479 = vmatpush1.msra.mxu0 0.0
  %480 = vmatprep.subr.mxu0 0.0
  %481 = vmatpush1.msra.mxu0 0.0
  %482 = vmatprep.subr.mxu0 0.0
  %483 = vmatpush1.msra.mxu0 0.0
  %484 = vmatprep.subr.mxu0 0.0
  %485 = vmatpush1.msra.mxu0 0.0
  %486 = vmatprep.subr.mxu0 0.0
  %487 = vmatpush1.msra.mxu0 0.0
  %488 = vmatprep.subr.mxu0 0.0
  %489 = vmatpush1.msra.mxu0 0.0
  %490 = vmatprep.subr.mxu0 0.0
  %491 = vmatpush1.msra.mxu0 0.0
  %492 = vmatprep.subr.mxu0 0.0
  %493 = vmatpush1.msra.mxu0 0.0
  %494 = vmatprep.subr.mxu0 0.0
  %495 = vmatpush1.msra.mxu0 0.0
  %496 = vmatprep.subr.mxu0 0.0
  %497 = vmatpush1.msra.mxu0 0.0
  %498 = vmatprep.subr.mxu0 0.0
  %499 = vmatpush1.msra.mxu0 0.0
  %500 = vmatprep.subr.mxu0 0.0
  %501 = vmatpush1.msra.mxu0 0.0
  %502 = vmatprep.mubr.f32.mxu0 0.0
  %503 = vmatmul.mubr.f32.gmra.mrb[0].mxu0 %v364
  %v504 = vpop.f32.mrb[0].mxu0
  %v505 = vadd.f32 %v360, %v504
  %v506 = vpop.f32.mrb[0].mxu0
  %507 = vmatprep.mubr.f32.mxu0 0.0
  %508 = vmatmul.mubr.f32.gmra.mrb[0].mxu0 %v367
  %v509 = vpop.f32.mrb[0].mxu0
  %v510 = vadd.f32 %v360, %v509
  %v511 = vpop.f32.mrb[0].mxu0
  %512 = vmatprep.mubr.f32.mxu0 0.0
  %513 = vmatmul.mubr.f32.gmra.mrb[0].mxu0 %v370
  %v514 = vpop.f32.mrb[0].mxu0
  %v515 = vadd.f32 %v360, %v514
  %v516 = vpop.f32.mrb[0].mxu0
  %517 = vmatprep.mubr.f32.mxu0 0.0
  %518 = vmatmul.mubr.f32.gmra.mrb[0].mxu0 %v373
  %v519 = vpop.f32.mrb[0].mxu0
  %v520 = vadd.f32 %v360, %v519
  %v521 = vpop.f32.mrb[0].mxu0
  %522 = vmatprep.mubr.f32.mxu0 0.0
  %523 = vmatmul.mubr.f32.gmra.mrb[0].mxu0 %v376
  %v524 = vpop.f32.mrb[0].mxu0
  %v525 = vadd.f32 %v360, %v524
  %v526 = vpop.f32.mrb[0].mxu0
  %527 = vmatprep.mubr.f32.mxu0 0.0
  %528 = vmatmul.mubr.f32.gmra.mrb[0].mxu0 %v379
  %v529 = vpop.f32.mrb[0].mxu0
  %v530 = vadd.f32 %v360, %v529
  %v531 = vpop.f32.mrb[0].mxu0
  %532 = vmatprep.mubr.f32.mxu0 0.0
  %533 = vmatmul.mubr.f32.gmra.mrb[0].mxu0 %v382
  %v534 = vpop.f32.mrb[0].mxu0
  %v535 = vadd.f32 %v360, %v534
  %v536 = vpop.f32.mrb[0].mxu0
  %537 = vmatprep.mubr.f32.mxu0 0.0
  %538 = vmatmul.mubr.f32.gmra.mrb[0].mxu0 %v385
  %v539 = vpop.f32.mrb[0].mxu0
  %v540 = vadd.f32 %v360, %v539
  %v541 = vpop.f32.mrb[0].mxu0
  %542 = vmatprep.mubr.f32.mxu0 0.0
  %543 = vmatmul.mubr.f32.gmra.mrb[0].mxu0 %v388
  %v544 = vpop.f32.mrb[0].mxu0
  %v545 = vadd.f32 %v360, %v544
  %v546 = vpop.f32.mrb[0].mxu0
  %547 = vmatprep.mubr.f32.mxu0 0.0
  %548 = vmatmul.mubr.f32.gmra.mrb[0].mxu0 %v391
  %v549 = vpop.f32.mrb[0].mxu0
  %v550 = vadd.f32 %v360, %v549
  %v551 = vpop.f32.mrb[0].mxu0
  %552 = vmatprep.mubr.f32.mxu0 0.0
  %553 = vmatmul.mubr.f32.gmra.mrb[0].mxu0 %v394
  %v554 = vpop.f32.mrb[0].mxu0
  %v555 = vadd.f32 %v360, %v554
  %v556 = vpop.f32.mrb[0].mxu0
  %557 = vmatprep.mubr.f32.mxu0 0.0
  %558 = vmatmul.mubr.f32.gmra.mrb[0].mxu0 %v397
  %v559 = vpop.f32.mrb[0].mxu0
  %v560 = vadd.f32 %v360, %v559
  %v561 = vpop.f32.mrb[0].mxu0
  %562 = vmatprep.mubr.f32.mxu0 0.0
  %563 = vmatmul.mubr.f32.gmra.mrb[0].mxu0 %v400
  %v564 = vpop.f32.mrb[0].mxu0
  %v565 = vadd.f32 %v360, %v564
  %v566 = vpop.f32.mrb[0].mxu0
  %567 = vmatprep.mubr.f32.mxu0 0.0
  %568 = vmatmul.mubr.f32.gmra.mrb[0].mxu0 %v403
  %v569 = vpop.f32.mrb[0].mxu0
  %v570 = vadd.f32 %v360, %v569
  %v571 = vpop.f32.mrb[0].mxu0
  %572 = vmatprep.mubr.f32.mxu0 0.0
  %573 = vmatmul.mubr.f32.gmra.mrb[0].mxu0 %v406
  %v574 = vpop.f32.mrb[0].mxu0
  %v575 = vadd.f32 %v360, %v574
  %v576 = vpop.f32.mrb[0].mxu0
  %577 = vmatprep.mubr.f32.mxu0 0.0
  %578 = vmatmul.mubr.f32.gmra.mrb[0].mxu0 %v409
  %v579 = vpop.f32.mrb[0].mxu0
  %v580 = vadd.f32 %v360, %v579
  %v581 = vpop.f32.mrb[0].mxu0
  %582 = vmatprep.mubr.f32.mxu0 0.0
  %583 = vmatmul.mubr.f32.gmra.mrb[0].mxu0 %v412
  %v584 = vpop.f32.mrb[0].mxu0
  %v585 = vadd.f32 %v360, %v584
  %v586 = vpop.f32.mrb[0].mxu0
  %587 = vmatprep.mubr.f32.mxu0 0.0
  %588 = vmatmul.mubr.f32.gmra.mrb[0].mxu0 %v415
  %v589 = vpop.f32.mrb[0].mxu0
  %v590 = vadd.f32 %v360, %v589
  %v591 = vpop.f32.mrb[0].mxu0
  %592 = vmatprep.mubr.f32.mxu0 0.0
  %593 = vmatmul.mubr.f32.gmra.mrb[0].mxu0 %v418
  %v594 = vpop.f32.mrb[0].mxu0
  %v595 = vadd.f32 %v360, %v594
  %v596 = vpop.f32.mrb[0].mxu0
  %597 = vmatprep.mubr.f32.mxu0 0.0
  %598 = vmatmul.mubr.f32.gmra.mrb[0].mxu0 %v421
  %v599 = vpop.f32.mrb[0].mxu0
  %v600 = vadd.f32 %v360, %v599
  %v601 = vpop.f32.mrb[0].mxu0
  %602 = vmatprep.mubr.f32.mxu0 0.0
  %603 = vmatmul.mubr.f32.gmra.mrb[0].mxu0 %v424
  %v604 = vpop.f32.mrb[0].mxu0
  %v605 = vadd.f32 %v360, %v604
  %v606 = vpop.f32.mrb[0].mxu0
  %607 = vmatprep.mubr.f32.mxu0 0.0
  %608 = vmatmul.mubr.f32.gmra.mrb[0].mxu0 %v427
  %v609 = vpop.f32.mrb[0].mxu0
  %v610 = vadd.f32 %v360, %v609
  %v611 = vpop.f32.mrb[0].mxu0
  %612 = vmatprep.mubr.f32.mxu0 0.0
  %613 = vmatmul.mubr.f32.gmra.mrb[0].mxu0 %v430
  %v614 = vpop.f32.mrb[0].mxu0
  %v615 = vadd.f32 %v360, %v614
  %v616 = vpop.f32.mrb[0].mxu0
  %617 = vmatprep.mubr.f32.mxu0 0.0
  %618 = vmatmul.mubr.f32.gmra.mrb[0].mxu0 %v433
  %v619 = vpop.f32.mrb[0].mxu0
  %v620 = vadd.f32 %v360, %v619
  %v621 = vpop.f32.mrb[0].mxu0
  %622 = vmatprep.mubr.f32.mxu0 0.0
  %623 = vmatmul.mubr.f32.gmra.mrb[0].mxu0 %v436
  %v624 = vpop.f32.mrb[0].mxu0
  %v625 = vadd.f32 %v360, %v624
  %v626 = vpop.f32.mrb[0].mxu0
  %627 = vdwg.mxu0
  %v628 = vmax.f32 %v505, 0.0
  %v629 = vmax.f32 %v510, 0.0
  %v630 = vmax.f32 %v515, 0.0
  %v631 = vmax.f32 %v520, 0.0
  %v632 = vmax.f32 %v525, 0.0
  %v633 = vmax.f32 %v530, 0.0
  %v634 = vmax.f32 %v535, 0.0
  %v635 = vmax.f32 %v540, 0.0
  %v636 = vmax.f32 %v545, 0.0
  %v637 = vmax.f32 %v550, 0.0
  %v638 = vmax.f32 %v555, 0.0
  %v639 = vmax.f32 %v560, 0.0
  %v640 = vmax.f32 %v565, 0.0
  %v641 = vmax.f32 %v570, 0.0
  %v642 = vmax.f32 %v575, 0.0
  %v643 = vmax.f32 %v580, 0.0
  %v644 = vmax.f32 %v585, 0.0
  %v645 = vmax.f32 %v590, 0.0
  %v646 = vmax.f32 %v595, 0.0
  %v647 = vmax.f32 %v600, 0.0
  %v648 = vmax.f32 %v605, 0.0
  %v649 = vmax.f32 %v610, 0.0
  %v650 = vmax.f32 %v615, 0.0
  %v651 = vmax.f32 %v620, 0.0
  %v652 = vmax.f32 %v625, 0.0
  %v653 = vld [vmem:[%s5] sm:$0xff]
  %v654 = vld [vmem:[%s5 + $0x8] sm:$0xff]
  %v655 = vld [vmem:[%s5 + $0x10] sm:$0xff]
  %v656 = vld [vmem:[%s5 + $0x18] sm:$0xff]
  %v657 = vld [vmem:[%s6] sm:$0x1]
  %v659 = vlaneseq
  %v660 = vshrl.u32 %v659, 7
  %v661 = vsub.s32 0, %v660
  %v662 = vrot.slane %v657, %v661
  %v665 = vsel %vm362, %v628, 0
  %v668 = vsel %vm362, %v629, 0
  %v671 = vsel %vm362, %v630, 0
  %v674 = vsel %vm362, %v631, 0
  %v677 = vsel %vm362, %v632, 0
  %v680 = vsel %vm362, %v633, 0
  %v683 = vsel %vm362, %v634, 0
  %v686 = vsel %vm362, %v635, 0
  %v689 = vsel %vm362, %v636, 0
  %v692 = vsel %vm362, %v637, 0
  %v695 = vsel %vm362, %v638, 0
  %v698 = vsel %vm362, %v639, 0
  %v701 = vsel %vm362, %v640, 0
  %v704 = vsel %vm362, %v641, 0
  %v707 = vsel %vm362, %v642, 0
  %v710 = vsel %vm362, %v643, 0
  %v713 = vsel %vm362, %v644, 0
  %v716 = vsel %vm362, %v645, 0
  %v719 = vsel %vm362, %v646, 0
  %v722 = vsel %vm362, %v647, 0
  %v725 = vsel %vm362, %v648, 0
  %v728 = vsel %vm362, %v649, 0
  %v731 = vsel %vm362, %v650, 0
  %v734 = vsel %vm362, %v651, 0
  %v737 = vsel %vm362, %v652, 0
  %739 = vmatprep.subr.mxu0 0.0
  %740 = vmatpush1.msra.mxu0 %v653
  %741 = vmatprep.subr.mxu0 0.0
  %742 = vmatpush1.msra.mxu0 %v654
  %743 = vmatprep.subr.mxu0 0.0
  %744 = vmatpush1.msra.mxu0 %v655
  %745 = vmatprep.subr.mxu0 0.0
  %746 = vmatpush1.msra.mxu0 %v656
  %747 = vmatprep.subr.mxu0 0.0
  %748 = vmatpush1.msra.mxu0 0.0
  %749 = vmatprep.subr.mxu0 0.0
  %750 = vmatpush1.msra.mxu0 0.0
  %751 = vmatprep.subr.mxu0 0.0
  %752 = vmatpush1.msra.mxu0 0.0
  %753 = vmatprep.subr.mxu0 0.0
  %754 = vmatpush1.msra.mxu0 0.0
  %755 = vmatprep.subr.mxu0 0.0
  %756 = vmatpush1.msra.mxu0 0.0
  %757 = vmatprep.subr.mxu0 0.0
  %758 = vmatpush1.msra.mxu0 0.0
  %759 = vmatprep.subr.mxu0 0.0
  %760 = vmatpush1.msra.mxu0 0.0
  %761 = vmatprep.subr.mxu0 0.0
  %762 = vmatpush1.msra.mxu0 0.0
  %763 = vmatprep.subr.mxu0 0.0
  %764 = vmatpush1.msra.mxu0 0.0
  %765 = vmatprep.subr.mxu0 0.0
  %766 = vmatpush1.msra.mxu0 0.0
  %767 = vmatprep.subr.mxu0 0.0
  %768 = vmatpush1.msra.mxu0 0.0
  %769 = vmatprep.subr.mxu0 0.0
  %770 = vmatpush1.msra.mxu0 0.0
  %771 = vmatprep.subr.mxu0 0.0
  %772 = vmatpush1.msra.mxu0 0.0
  %773 = vmatprep.subr.mxu0 0.0
  %774 = vmatpush1.msra.mxu0 0.0
  %775 = vmatprep.subr.mxu0 0.0
  %776 = vmatpush1.msra.mxu0 0.0
  %777 = vmatprep.subr.mxu0 0.0
  %778 = vmatpush1.msra.mxu0 0.0
  %779 = vmatprep.subr.mxu0 0.0
  %780 = vmatpush1.msra.mxu0 0.0
  %781 = vmatprep.subr.mxu0 0.0
  %782 = vmatpush1.msra.mxu0 0.0
  %783 = vmatprep.subr.mxu0 0.0
  %784 = vmatpush1.msra.mxu0 0.0
  %785 = vmatprep.subr.mxu0 0.0
  %786 = vmatpush1.msra.mxu0 0.0
  %787 = vmatprep.subr.mxu0 0.0
  %788 = vmatpush1.msra.mxu0 0.0
  %789 = vmatprep.subr.mxu0 0.0
  %790 = vmatpush1.msra.mxu0 0.0
  %791 = vmatprep.subr.mxu0 0.0
  %792 = vmatpush1.msra.mxu0 0.0
  %793 = vmatprep.subr.mxu0 0.0
  %794 = vmatpush1.msra.mxu0 0.0
  %795 = vmatprep.subr.mxu0 0.0
  %796 = vmatpush1.msra.mxu0 0.0
  %797 = vmatprep.subr.mxu0 0.0
  %798 = vmatpush1.msra.mxu0 0.0
  %799 = vmatprep.subr.mxu0 0.0
  %800 = vmatpush1.msra.mxu0 0.0
  %801 = vmatprep.subr.mxu0 0.0
  %802 = vmatpush1.msra.mxu0 0.0
  %803 = vmatprep.mubr.f32.mxu0 0.0
  %804 = vmatmul.mubr.f32.gmra.mrb[0].mxu0 %v665
  %v805 = vpop.f32.mrb[0].mxu0
  %v806 = vadd.f32 %v662, %v805
  %v807 = vpop.f32.mrb[0].mxu0
  %808 = vmatprep.mubr.f32.mxu0 0.0
  %809 = vmatmul.mubr.f32.gmra.mrb[0].mxu0 %v668
  %v810 = vpop.f32.mrb[0].mxu0
  %v811 = vadd.f32 %v662, %v810
  %v812 = vpop.f32.mrb[0].mxu0
  %813 = vmatprep.mubr.f32.mxu0 0.0
  %814 = vmatmul.mubr.f32.gmra.mrb[0].mxu0 %v671
  %v815 = vpop.f32.mrb[0].mxu0
  %v816 = vadd.f32 %v662, %v815
  %v817 = vpop.f32.mrb[0].mxu0
  %818 = vmatprep.mubr.f32.mxu0 0.0
  %819 = vmatmul.mubr.f32.gmra.mrb[0].mxu0 %v674
  %v820 = vpop.f32.mrb[0].mxu0
  %v821 = vadd.f32 %v662, %v820
  %v822 = vpop.f32.mrb[0].mxu0
  %823 = vmatprep.mubr.f32.mxu0 0.0
  %824 = vmatmul.mubr.f32.gmra.mrb[0].mxu0 %v677
  %v825 = vpop.f32.mrb[0].mxu0
  %v826 = vadd.f32 %v662, %v825
  %v827 = vpop.f32.mrb[0].mxu0
  %828 = vmatprep.mubr.f32.mxu0 0.0
  %829 = vmatmul.mubr.f32.gmra.mrb[0].mxu0 %v680
  %v830 = vpop.f32.mrb[0].mxu0
  %v831 = vadd.f32 %v662, %v830
  %v832 = vpop.f32.mrb[0].mxu0
  %833 = vmatprep.mubr.f32.mxu0 0.0
  %834 = vmatmul.mubr.f32.gmra.mrb[0].mxu0 %v683
  %v835 = vpop.f32.mrb[0].mxu0
  %v836 = vadd.f32 %v662, %v835
  %v837 = vpop.f32.mrb[0].mxu0
  %838 = vmatprep.mubr.f32.mxu0 0.0
  %839 = vmatmul.mubr.f32.gmra.mrb[0].mxu0 %v686
  %v840 = vpop.f32.mrb[0].mxu0
  %v841 = vadd.f32 %v662, %v840
  %v842 = vpop.f32.mrb[0].mxu0
  %843 = vmatprep.mubr.f32.mxu0 0.0
  %844 = vmatmul.mubr.f32.gmra.mrb[0].mxu0 %v689
  %v845 = vpop.f32.mrb[0].mxu0
  %v846 = vadd.f32 %v662, %v845
  %v847 = vpop.f32.mrb[0].mxu0
  %848 = vmatprep.mubr.f32.mxu0 0.0
  %849 = vmatmul.mubr.f32.gmra.mrb[0].mxu0 %v692
  %v850 = vpop.f32.mrb[0].mxu0
  %v851 = vadd.f32 %v662, %v850
  %v852 = vpop.f32.mrb[0].mxu0
  %853 = vmatprep.mubr.f32.mxu0 0.0
  %854 = vmatmul.mubr.f32.gmra.mrb[0].mxu0 %v695
  %v855 = vpop.f32.mrb[0].mxu0
  %v856 = vadd.f32 %v662, %v855
  %v857 = vpop.f32.mrb[0].mxu0
  %858 = vmatprep.mubr.f32.mxu0 0.0
  %859 = vmatmul.mubr.f32.gmra.mrb[0].mxu0 %v698
  %v860 = vpop.f32.mrb[0].mxu0
  %v861 = vadd.f32 %v662, %v860
  %v862 = vpop.f32.mrb[0].mxu0
  %863 = vmatprep.mubr.f32.mxu0 0.0
  %864 = vmatmul.mubr.f32.gmra.mrb[0].mxu0 %v701
  %v865 = vpop.f32.mrb[0].mxu0
  %v866 = vadd.f32 %v662, %v865
  %v867 = vpop.f32.mrb[0].mxu0
  %868 = vmatprep.mubr.f32.mxu0 0.0
  %869 = vmatmul.mubr.f32.gmra.mrb[0].mxu0 %v704
  %v870 = vpop.f32.mrb[0].mxu0
  %v871 = vadd.f32 %v662, %v870
  %v872 = vpop.f32.mrb[0].mxu0
  %873 = vmatprep.mubr.f32.mxu0 0.0
  %874 = vmatmul.mubr.f32.gmra.mrb[0].mxu0 %v707
  %v875 = vpop.f32.mrb[0].mxu0
  %v876 = vadd.f32 %v662, %v875
  %v877 = vpop.f32.mrb[0].mxu0
  %878 = vmatprep.mubr.f32.mxu0 0.0
  %879 = vmatmul.mubr.f32.gmra.mrb[0].mxu0 %v710
  %v880 = vpop.f32.mrb[0].mxu0
  %v881 = vadd.f32 %v662, %v880
  %v882 = vpop.f32.mrb[0].mxu0
  %883 = vmatprep.mubr.f32.mxu0 0.0
  %884 = vmatmul.mubr.f32.gmra.mrb[0].mxu0 %v713
  %v885 = vpop.f32.mrb[0].mxu0
  %v886 = vadd.f32 %v662, %v885
  %v887 = vpop.f32.mrb[0].mxu0
  %888 = vmatprep.mubr.f32.mxu0 0.0
  %889 = vmatmul.mubr.f32.gmra.mrb[0].mxu0 %v716
  %v890 = vpop.f32.mrb[0].mxu0
  %v891 = vadd.f32 %v662, %v890
  %v892 = vpop.f32.mrb[0].mxu0
  %893 = vmatprep.mubr.f32.mxu0 0.0
  %894 = vmatmul.mubr.f32.gmra.mrb[0].mxu0 %v719
  %v895 = vpop.f32.mrb[0].mxu0
  %v896 = vadd.f32 %v662, %v895
  %v897 = vpop.f32.mrb[0].mxu0
  %898 = vmatprep.mubr.f32.mxu0 0.0
  %899 = vmatmul.mubr.f32.gmra.mrb[0].mxu0 %v722
  %v900 = vpop.f32.mrb[0].mxu0
  %v901 = vadd.f32 %v662, %v900
  %v902 = vpop.f32.mrb[0].mxu0
  %903 = vmatprep.mubr.f32.mxu0 0.0
  %904 = vmatmul.mubr.f32.gmra.mrb[0].mxu0 %v725
  %v905 = vpop.f32.mrb[0].mxu0
  %v906 = vadd.f32 %v662, %v905
  %v907 = vpop.f32.mrb[0].mxu0
  %908 = vmatprep.mubr.f32.mxu0 0.0
  %909 = vmatmul.mubr.f32.gmra.mrb[0].mxu0 %v728
  %v910 = vpop.f32.mrb[0].mxu0
  %v911 = vadd.f32 %v662, %v910
  %v912 = vpop.f32.mrb[0].mxu0
  %913 = vmatprep.mubr.f32.mxu0 0.0
  %914 = vmatmul.mubr.f32.gmra.mrb[0].mxu0 %v731
  %v915 = vpop.f32.mrb[0].mxu0
  %v916 = vadd.f32 %v662, %v915
  %v917 = vpop.f32.mrb[0].mxu0
  %918 = vmatprep.mubr.f32.mxu0 0.0
  %919 = vmatmul.mubr.f32.gmra.mrb[0].mxu0 %v734
  %v920 = vpop.f32.mrb[0].mxu0
  %v921 = vadd.f32 %v662, %v920
  %v922 = vpop.f32.mrb[0].mxu0
  %923 = vmatprep.mubr.f32.mxu0 0.0
  %924 = vmatmul.mubr.f32.gmra.mrb[0].mxu0 %v737
  %v925 = vpop.f32.mrb[0].mxu0
  %v926 = vadd.f32 %v662, %v925
  %v927 = vpop.f32.mrb[0].mxu0
  %928 = vdwg.mxu0
  %v929 = vxor.u32 %v806, 2147483648
  %v930 = vxor.u32 %v811, 2147483648
  %v931 = vxor.u32 %v816, 2147483648
  %v932 = vxor.u32 %v821, 2147483648
  %v933 = vxor.u32 %v826, 2147483648
  %v934 = vxor.u32 %v831, 2147483648
  %v935 = vxor.u32 %v836, 2147483648
  %v936 = vxor.u32 %v841, 2147483648
  %v937 = vxor.u32 %v846, 2147483648
  %v938 = vxor.u32 %v851, 2147483648
  %v939 = vxor.u32 %v856, 2147483648
  %v940 = vxor.u32 %v861, 2147483648
  %v941 = vxor.u32 %v866, 2147483648
  %v942 = vxor.u32 %v871, 2147483648
  %v943 = vxor.u32 %v876, 2147483648
  %v944 = vxor.u32 %v881, 2147483648
  %v945 = vxor.u32 %v886, 2147483648
  %v946 = vxor.u32 %v891, 2147483648
  %v947 = vxor.u32 %v896, 2147483648
  %v948 = vxor.u32 %v901, 2147483648
  %v949 = vxor.u32 %v906, 2147483648
  %v950 = vxor.u32 %v911, 2147483648
  %v951 = vxor.u32 %v916, 2147483648
  %v952 = vxor.u32 %v921, 2147483648
  %v953 = vxor.u32 %v926, 2147483648
  %v954 = vmul.f32 %v929, 1.442695
  %v955 = vpow.pop %v954
  %v956 = vmul.f32 %v930, 1.442695
  %v957 = vpow.pop %v956
  %v958 = vmul.f32 %v931, 1.442695
  %v959 = vpow.pop %v958
  %v960 = vmul.f32 %v932, 1.442695
  %v961 = vpow.pop %v960
  %v962 = vmul.f32 %v933, 1.442695
  %v963 = vpow.pop %v962
  %v964 = vmul.f32 %v934, 1.442695
  %v965 = vpow.pop %v964
  %v966 = vmul.f32 %v935, 1.442695
  %v967 = vpow.pop %v966
  %v968 = vmul.f32 %v936, 1.442695
  %v969 = vpow.pop %v968
  %v970 = vmul.f32 %v937, 1.442695
  %v971 = vpow.pop %v970
  %v972 = vmul.f32 %v938, 1.442695
  %v973 = vpow.pop %v972
  %v974 = vmul.f32 %v939, 1.442695
  %v975 = vpow.pop %v974
  %v976 = vmul.f32 %v940, 1.442695
  %v977 = vpow.pop %v976
  %v978 = vmul.f32 %v941, 1.442695
  %v979 = vpow.pop %v978
  %v980 = vmul.f32 %v942, 1.442695
  %v981 = vpow.pop %v980
  %v982 = vmul.f32 %v943, 1.442695
  %v983 = vpow.pop %v982
  %v984 = vmul.f32 %v944, 1.442695
  %v985 = vpow.pop %v984
  %v986 = vmul.f32 %v945, 1.442695
  %v987 = vpow.pop %v986
  %v988 = vmul.f32 %v946, 1.442695
  %v989 = vpow.pop %v988
  %v990 = vmul.f32 %v947, 1.442695
  %v991 = vpow.pop %v990
  %v992 = vmul.f32 %v948, 1.442695
  %v993 = vpow.pop %v992
  %v994 = vmul.f32 %v949, 1.442695
  %v995 = vpow.pop %v994
  %v996 = vmul.f32 %v950, 1.442695
  %v997 = vpow.pop %v996
  %v998 = vmul.f32 %v951, 1.442695
  %v999 = vpow.pop %v998
  %v1000 = vmul.f32 %v952, 1.442695
  %v1001 = vpow.pop %v1000
  %v1002 = vmul.f32 %v953, 1.442695
  %v1003 = vpow.pop %v1002
  %v1004 = vadd.f32 %v955, 1.0
  %v1005 = vadd.f32 %v957, 1.0
  %v1006 = vadd.f32 %v959, 1.0
  %v1007 = vadd.f32 %v961, 1.0
  %v1008 = vadd.f32 %v963, 1.0
  %v1009 = vadd.f32 %v965, 1.0
  %v1010 = vadd.f32 %v967, 1.0
  %v1011 = vadd.f32 %v969, 1.0
  %v1012 = vadd.f32 %v971, 1.0
  %v1013 = vadd.f32 %v973, 1.0
  %v1014 = vadd.f32 %v975, 1.0
  %v1015 = vadd.f32 %v977, 1.0
  %v1016 = vadd.f32 %v979, 1.0
  %v1017 = vadd.f32 %v981, 1.0
  %v1018 = vadd.f32 %v983, 1.0
  %v1019 = vadd.f32 %v985, 1.0
  %v1020 = vadd.f32 %v987, 1.0
  %v1021 = vadd.f32 %v989, 1.0
  %v1022 = vadd.f32 %v991, 1.0
  %v1023 = vadd.f32 %v993, 1.0
  %v1024 = vadd.f32 %v995, 1.0
  %v1025 = vadd.f32 %v997, 1.0
  %v1026 = vadd.f32 %v999, 1.0
  %v1027 = vadd.f32 %v1001, 1.0
  %v1028 = vadd.f32 %v1003, 1.0
  %v1029 = vrcp.pop %v1004
  %v1030 = vmul.f32 1.0, %v1029
  %v1031 = vrcp.pop %v1005
  %v1032 = vmul.f32 1.0, %v1031
  %v1033 = vrcp.pop %v1006
  %v1034 = vmul.f32 1.0, %v1033
  %v1035 = vrcp.pop %v1007
  %v1036 = vmul.f32 1.0, %v1035
  %v1037 = vrcp.pop %v1008
  %v1038 = vmul.f32 1.0, %v1037
  %v1039 = vrcp.pop %v1009
  %v1040 = vmul.f32 1.0, %v1039
  %v1041 = vrcp.pop %v1010
  %v1042 = vmul.f32 1.0, %v1041
  %v1043 = vrcp.pop %v1011
  %v1044 = vmul.f32 1.0, %v1043
  %v1045 = vrcp.pop %v1012
  %v1046 = vmul.f32 1.0, %v1045
  %v1047 = vrcp.pop %v1013
  %v1048 = vmul.f32 1.0, %v1047
  %v1049 = vrcp.pop %v1014
  %v1050 = vmul.f32 1.0, %v1049
  %v1051 = vrcp.pop %v1015
  %v1052 = vmul.f32 1.0, %v1051
  %v1053 = vrcp.pop %v1016
  %v1054 = vmul.f32 1.0, %v1053
  %v1055 = vrcp.pop %v1017
  %v1056 = vmul.f32 1.0, %v1055
  %v1057 = vrcp.pop %v1018
  %v1058 = vmul.f32 1.0, %v1057
  %v1059 = vrcp.pop %v1019
  %v1060 = vmul.f32 1.0, %v1059
  %v1061 = vrcp.pop %v1020
  %v1062 = vmul.f32 1.0, %v1061
  %v1063 = vrcp.pop %v1021
  %v1064 = vmul.f32 1.0, %v1063
  %v1065 = vrcp.pop %v1022
  %v1066 = vmul.f32 1.0, %v1065
  %v1067 = vrcp.pop %v1023
  %v1068 = vmul.f32 1.0, %v1067
  %v1069 = vrcp.pop %v1024
  %v1070 = vmul.f32 1.0, %v1069
  %v1071 = vrcp.pop %v1025
  %v1072 = vmul.f32 1.0, %v1071
  %v1073 = vrcp.pop %v1026
  %v1074 = vmul.f32 1.0, %v1073
  %v1075 = vrcp.pop %v1027
  %v1076 = vmul.f32 1.0, %v1075
  %v1077 = vrcp.pop %v1028
  %v1078 = vmul.f32 1.0, %v1077
  %vm1079 = vcmask 64512
  %1080 = vst.msk [vmem:[%s7] sm:$0xff] %vm1079, %v1030
  %1081 = vst.msk [vmem:[%s7 + $0x8] sm:$0xff] %vm1079, %v1032
  %1082 = vst.msk [vmem:[%s7 + $0x10] sm:$0xff] %vm1079, %v1034
  %1083 = vst.msk [vmem:[%s7 + $0x18] sm:$0xff] %vm1079, %v1036
  %1084 = vst.msk [vmem:[%s7 + $0x20] sm:$0xff] %vm1079, %v1038
  %1085 = vst.msk [vmem:[%s7 + $0x28] sm:$0xff] %vm1079, %v1040
  %1086 = vst.msk [vmem:[%s7 + $0x30] sm:$0xff] %vm1079, %v1042
  %1087 = vst.msk [vmem:[%s7 + $0x38] sm:$0xff] %vm1079, %v1044
  %1088 = vst.msk [vmem:[%s7 + $0x40] sm:$0xff] %vm1079, %v1046
  %1089 = vst.msk [vmem:[%s7 + $0x48] sm:$0xff] %vm1079, %v1048
  %1090 = vst.msk [vmem:[%s7 + $0x50] sm:$0xff] %vm1079, %v1050
  %1091 = vst.msk [vmem:[%s7 + $0x58] sm:$0xff] %vm1079, %v1052
  %1092 = vst.msk [vmem:[%s7 + $0x60] sm:$0xff] %vm1079, %v1054
  %1093 = vst.msk [vmem:[%s7 + $0x68] sm:$0xff] %vm1079, %v1056
  %1094 = vst.msk [vmem:[%s7 + $0x70] sm:$0xff] %vm1079, %v1058
  %1095 = vst.msk [vmem:[%s7 + $0x78] sm:$0xff] %vm1079, %v1060
  %1096 = vst.msk [vmem:[%s7 + $0x80] sm:$0xff] %vm1079, %v1062
  %1097 = vst.msk [vmem:[%s7 + $0x88] sm:$0xff] %vm1079, %v1064
  %1098 = vst.msk [vmem:[%s7 + $0x90] sm:$0xff] %vm1079, %v1066
  %1099 = vst.msk [vmem:[%s7 + $0x98] sm:$0xff] %vm1079, %v1068
  %1100 = vst.msk [vmem:[%s7 + $0xa0] sm:$0xff] %vm1079, %v1070
  %1101 = vst.msk [vmem:[%s7 + $0xa8] sm:$0xff] %vm1079, %v1072
  %1102 = vst.msk [vmem:[%s7 + $0xb0] sm:$0xff] %vm1079, %v1074
  %1103 = vst.msk [vmem:[%s7 + $0xb8] sm:$0xff] %vm1079, %v1076
  %1104 = vst.msk [vmem:[%s7 + $0xc0] sm:$0xff] %vm1079, %v1078
  // Predicated region
  $region30: #{tpu_custom_call.1} parent=0 // pred_check
    _
  $region31: #{tpu_custom_call.1} parent=0 // pred_check_branch
    %1106 = sbr.rel (0) target = $region33
  $region32: #{tpu_custom_call.1} parent=0 // pred_region
    _
  $region33: #{tpu_custom_call.1} parent=0 // pred_fallthru
    _
  // Predicated region
  $region34: #{tpu_custom_call.1} parent=0 // pred_check
    _
  $region35: #{tpu_custom_call.1} parent=0 // pred_check_branch
    %1108 = sbr.rel (0) target = $region37
  $region36: #{tpu_custom_call.1} parent=0 // pred_region
    _
  $region37: #{tpu_custom_call.1} parent=0 // pred_fallthru
    _

// kernel: tpu_custom_call.1
$region0: #{tpu_custom_call.1}
  #allocation0 [shape = 'u32[]', space=smem, size = 0x4, offset = 0x4, fixed_abs, tag = 'smem constant byte address 0x4 - core index']
  #allocation1 [shape = 'u32[144,128]{1,0:T(1,128)}', space=vmem, size = 0x12000, scoped, tag = 'internal scratch']
  %s0 = inlined_call_operand.vmem [shape: f32[200,16], index: 0, kind: input, shape index: {}]
  %s1 = inlined_call_operand.vmem [shape: f32[16,32], index: 1, kind: input, shape index: {}]
  %s2 = inlined_call_operand.vmem [shape: f32[1,32], index: 2, kind: input, shape index: {}]
  %s3 = inlined_call_operand.vmem [shape: f32[32,32], index: 3, kind: input, shape index: {}]
  %s4 = inlined_call_operand.vmem [shape: f32[1,32], index: 4, kind: input, shape index: {}]
  %s5 = inlined_call_operand.vmem [shape: f32[32,8], index: 5, kind: input, shape index: {}]
  %s6 = inlined_call_operand.vmem [shape: f32[1,8], index: 6, kind: input, shape index: {}]
  %s7 = inlined_call_operand.vmem [shape: f32[200,8], index: 7, kind: output, shape index: {}]
  %s8 = sld [smem:[#allocation0]]
  $region38: #{tpu_custom_call.1} parent=0
    _
  %s10 = ssub.s32 1, %s8
  %s11 = scalar_select 0, %s10, %s8
  // Predicated region
  $region2: #{tpu_custom_call.1} parent=0 // pred_check
    _
  $region3: #{tpu_custom_call.1} parent=0 // pred_check_branch
    %13 = sbr.rel (0) target = $region5
  $region4: #{tpu_custom_call.1} parent=0 // pred_region
    _
  $region5: #{tpu_custom_call.1} parent=0 // pred_fallthru
    _
  // Predicated region
  $region6: #{tpu_custom_call.1} parent=0 // pred_check
    _
  $region7: #{tpu_custom_call.1} parent=0 // pred_check_branch
    %15 = sbr.rel (0) target = $region9
  $region8: #{tpu_custom_call.1} parent=0 // pred_region
    _
  $region9: #{tpu_custom_call.1} parent=0 // pred_fallthru
    _
  // Predicated region
  $region10: #{tpu_custom_call.1} parent=0 // pred_check
    _
  $region11: #{tpu_custom_call.1} parent=0 // pred_check_branch
    %17 = sbr.rel (0) target = $region13
  $region12: #{tpu_custom_call.1} parent=0 // pred_region
    _
  $region13: #{tpu_custom_call.1} parent=0 // pred_fallthru
    _
  // Predicated region
  $region14: #{tpu_custom_call.1} parent=0 // pred_check
    _
  $region15: #{tpu_custom_call.1} parent=0 // pred_check_branch
    %19 = sbr.rel (0) target = $region17
  $region16: #{tpu_custom_call.1} parent=0 // pred_region
    _
  $region17: #{tpu_custom_call.1} parent=0 // pred_fallthru
    _
  // Predicated region
  $region18: #{tpu_custom_call.1} parent=0 // pred_check
    _
  $region19: #{tpu_custom_call.1} parent=0 // pred_check_branch
    %21 = sbr.rel (0) target = $region21
  $region20: #{tpu_custom_call.1} parent=0 // pred_region
    _
  $region21: #{tpu_custom_call.1} parent=0 // pred_fallthru
    _
  // Predicated region
  $region22: #{tpu_custom_call.1} parent=0 // pred_check
    _
  $region23: #{tpu_custom_call.1} parent=0 // pred_check_branch
    %23 = sbr.rel (0) target = $region25
  $region24: #{tpu_custom_call.1} parent=0 // pred_region
    _
  $region25: #{tpu_custom_call.1} parent=0 // pred_fallthru
    _
  // Predicated region
  $region26: #{tpu_custom_call.1} parent=0 // pred_check
    _
  $region27: #{tpu_custom_call.1} parent=0 // pred_check_branch
    %25 = sbr.rel (0) target = $region29
  $region28: #{tpu_custom_call.1} parent=0 // pred_region
    _
  $region29: #{tpu_custom_call.1} parent=0 // pred_fallthru
    _
  %v26 = vld [vmem:[%s0] sm:$0xff]
  %v27 = vld [vmem:[%s0 + $0x8] sm:$0xff]
  %v28 = vld [vmem:[%s0 + $0x10] sm:$0xff]
  %v29 = vld [vmem:[%s0 + $0x18] sm:$0xff]
  %v30 = vld [vmem:[%s0 + $0x20] sm:$0xff]
  %v31 = vld [vmem:[%s0 + $0x28] sm:$0xff]
  %v32 = vld [vmem:[%s0 + $0x30] sm:$0xff]
  %v33 = vld [vmem:[%s0 + $0x38] sm:$0xff]
  %v34 = vld [vmem:[%s0 + $0x40] sm:$0xff]
  %v35 = vld [vmem:[%s0 + $0x48] sm:$0xff]
  %v36 = vld [vmem:[%s0 + $0x50] sm:$0xff]
  %v37 = vld [vmem:[%s0 + $0x58] sm:$0xff]
  %v38 = vld [vmem:[%s0 + $0x60] sm:$0xff]
  %v39 = vld [vmem:[%s0 + $0x68] sm:$0xff]
  %v40 = vld [vmem:[%s0 + $0x70] sm:$0xff]
  %v41 = vld [vmem:[%s0 + $0x78] sm:$0xff]
  %v42 = vld [vmem:[%s0 + $0x80] sm:$0xff]
  %v43 = vld [vmem:[%s0 + $0x88] sm:$0xff]
  %v44 = vld [vmem:[%s0 + $0x90] sm:$0xff]
  %v45 = vld [vmem:[%s0 + $0x98] sm:$0xff]
  %v46 = vld [vmem:[%s0 + $0xa0] sm:$0xff]
  %v47 = vld [vmem:[%s0 + $0xa8] sm:$0xff]
  %v48 = vld [vmem:[%s0 + $0xb0] sm:$0xff]
  %v49 = vld [vmem:[%s0 + $0xb8] sm:$0xff]
  %v50 = vld [vmem:[%s0 + $0xc0] sm:$0xff]
  %v51 = vld [vmem:[%s1] sm:$0xff]
  %v52 = vld [vmem:[%s1 + $0x8] sm:$0xff]
  %v53 = vld [vmem:[%s2] sm:$0x1]
  %v55 = vlaneseq
  %v56 = vshrl.u32 %v55, 7
  %v57 = vsub.s32 0, %v56
  %v58 = vrot.slane %v53, %v57
  %vm60 = vcmask 130048
  %v62 = vsel %vm60, %v26, 0
  %v65 = vsel %vm60, %v27, 0
  %v68 = vsel %vm60, %v28, 0
  %v71 = vsel %vm60, %v29, 0
  %v74 = vsel %vm60, %v30, 0
  %v77 = vsel %vm60, %v31, 0
  %v80 = vsel %vm60, %v32, 0
  %v83 = vsel %vm60, %v33, 0
  %v86 = vsel %vm60, %v34, 0
  %v89 = vsel %vm60, %v35, 0
  %v92 = vsel %vm60, %v36, 0
  %v95 = vsel %vm60, %v37, 0
  %v98 = vsel %vm60, %v38, 0
  %v101 = vsel %vm60, %v39, 0
  %v104 = vsel %vm60, %v40, 0
  %v107 = vsel %vm60, %v41, 0
  %v110 = vsel %vm60, %v42, 0
  %v113 = vsel %vm60, %v43, 0
  %v116 = vsel %vm60, %v44, 0
  %v119 = vsel %vm60, %v45, 0
  %v122 = vsel %vm60, %v46, 0
  %v125 = vsel %vm60, %v47, 0
  %v128 = vsel %vm60, %v48, 0
  %v131 = vsel %vm60, %v49, 0
  %v134 = vsel %vm60, %v50, 0
  %136 = vmatprep.subr.mxu0 0.0
  %137 = vmatpush1.msra.mxu0 %v51
  %138 = vmatprep.subr.mxu0 0.0
  %139 = vmatpush1.msra.mxu0 %v52
  %140 = vmatprep.subr.mxu0 0.0
  %141 = vmatpush1.msra.mxu0 0.0
  %142 = vmatprep.subr.mxu0 0.0
  %143 = vmatpush1.msra.mxu0 0.0
  %144 = vmatprep.subr.mxu0 0.0
  %145 = vmatpush1.msra.mxu0 0.0
  %146 = vmatprep.subr.mxu0 0.0
  %147 = vmatpush1.msra.mxu0 0.0
  %148 = vmatprep.subr.mxu0 0.0
  %149 = vmatpush1.msra.mxu0 0.0
  %150 = vmatprep.subr.mxu0 0.0
  %151 = vmatpush1.msra.mxu0 0.0
  %152 = vmatprep.subr.mxu0 0.0
  %153 = vmatpush1.msra.mxu0 0.0
  %154 = vmatprep.subr.mxu0 0.0
  %155 = vmatpush1.msra.mxu0 0.0
  %156 = vmatprep.subr.mxu0 0.0
  %157 = vmatpush1.msra.mxu0 0.0
  %158 = vmatprep.subr.mxu0 0.0
  %159 = vmatpush1.msra.mxu0 0.0
  %160 = vmatprep.subr.mxu0 0.0
  %161 = vmatpush1.msra.mxu0 0.0
  %162 = vmatprep.subr.mxu0 0.0
  %163 = vmatpush1.msra.mxu0 0.0
  %164 = vmatprep.subr.mxu0 0.0
  %165 = vmatpush1.msra.mxu0 0.0
  %166 = vmatprep.subr.mxu0 0.0
  %167 = vmatpush1.msra.mxu0 0.0
  %168 = vmatprep.subr.mxu0 0.0
  %169 = vmatpush1.msra.mxu0 0.0
  %170 = vmatprep.subr.mxu0 0.0
  %171 = vmatpush1.msra.mxu0 0.0
  %172 = vmatprep.subr.mxu0 0.0
  %173 = vmatpush1.msra.mxu0 0.0
  %174 = vmatprep.subr.mxu0 0.0
  %175 = vmatpush1.msra.mxu0 0.0
  %176 = vmatprep.subr.mxu0 0.0
  %177 = vmatpush1.msra.mxu0 0.0
  %178 = vmatprep.subr.mxu0 0.0
  %179 = vmatpush1.msra.mxu0 0.0
  %180 = vmatprep.subr.mxu0 0.0
  %181 = vmatpush1.msra.mxu0 0.0
  %182 = vmatprep.subr.mxu0 0.0
  %183 = vmatpush1.msra.mxu0 0.0
  %184 = vmatprep.subr.mxu0 0.0
  %185 = vmatpush1.msra.mxu0 0.0
  %186 = vmatprep.subr.mxu0 0.0
  %187 = vmatpush1.msra.mxu0 0.0
  %188 = vmatprep.subr.mxu0 0.0
  %189 = vmatpush1.msra.mxu0 0.0
  %190 = vmatprep.subr.mxu0 0.0
  %191 = vmatpush1.msra.mxu0 0.0
  %192 = vmatprep.subr.mxu0 0.0
  %193 = vmatpush1.msra.mxu0 0.0
  %194 = vmatprep.subr.mxu0 0.0
  %195 = vmatpush1.msra.mxu0 0.0
  %196 = vmatprep.subr.mxu0 0.0
  %197 = vmatpush1.msra.mxu0 0.0
  %198 = vmatprep.subr.mxu0 0.0
  %199 = vmatpush1.msra.mxu0 0.0
  %200 = vmatprep.mubr.f32.mxu0 0.0
  %201 = vmatmul.mubr.f32.gmra.mrb[0].mxu0 %v62
  %v202 = vpop.f32.mrb[0].mxu0
  %v203 = vadd.f32 %v58, %v202
  %v204 = vpop.f32.mrb[0].mxu0
  %205 = vmatprep.mubr.f32.mxu0 0.0
  %206 = vmatmul.mubr.f32.gmra.mrb[0].mxu0 %v65
  %v207 = vpop.f32.mrb[0].mxu0
  %v208 = vadd.f32 %v58, %v207
  %v209 = vpop.f32.mrb[0].mxu0
  %210 = vmatprep.mubr.f32.mxu0 0.0
  %211 = vmatmul.mubr.f32.gmra.mrb[0].mxu0 %v68
  %v212 = vpop.f32.mrb[0].mxu0
  %v213 = vadd.f32 %v58, %v212
  %v214 = vpop.f32.mrb[0].mxu0
  %215 = vmatprep.mubr.f32.mxu0 0.0
  %216 = vmatmul.mubr.f32.gmra.mrb[0].mxu0 %v71
  %v217 = vpop.f32.mrb[0].mxu0
  %v218 = vadd.f32 %v58, %v217
  %v219 = vpop.f32.mrb[0].mxu0
  %220 = vmatprep.mubr.f32.mxu0 0.0
  %221 = vmatmul.mubr.f32.gmra.mrb[0].mxu0 %v74
  %v222 = vpop.f32.mrb[0].mxu0
  %v223 = vadd.f32 %v58, %v222
  %v224 = vpop.f32.mrb[0].mxu0
  %225 = vmatprep.mubr.f32.mxu0 0.0
  %226 = vmatmul.mubr.f32.gmra.mrb[0].mxu0 %v77
  %v227 = vpop.f32.mrb[0].mxu0
  %v228 = vadd.f32 %v58, %v227
  %v229 = vpop.f32.mrb[0].mxu0
  %230 = vmatprep.mubr.f32.mxu0 0.0
  %231 = vmatmul.mubr.f32.gmra.mrb[0].mxu0 %v80
  %v232 = vpop.f32.mrb[0].mxu0
  %v233 = vadd.f32 %v58, %v232
  %v234 = vpop.f32.mrb[0].mxu0
  %235 = vmatprep.mubr.f32.mxu0 0.0
  %236 = vmatmul.mubr.f32.gmra.mrb[0].mxu0 %v83
  %v237 = vpop.f32.mrb[0].mxu0
  %v238 = vadd.f32 %v58, %v237
  %v239 = vpop.f32.mrb[0].mxu0
  %240 = vmatprep.mubr.f32.mxu0 0.0
  %241 = vmatmul.mubr.f32.gmra.mrb[0].mxu0 %v86
  %v242 = vpop.f32.mrb[0].mxu0
  %v243 = vadd.f32 %v58, %v242
  %v244 = vpop.f32.mrb[0].mxu0
  %245 = vmatprep.mubr.f32.mxu0 0.0
  %246 = vmatmul.mubr.f32.gmra.mrb[0].mxu0 %v89
  %v247 = vpop.f32.mrb[0].mxu0
  %v248 = vadd.f32 %v58, %v247
  %v249 = vpop.f32.mrb[0].mxu0
  %250 = vmatprep.mubr.f32.mxu0 0.0
  %251 = vmatmul.mubr.f32.gmra.mrb[0].mxu0 %v92
  %v252 = vpop.f32.mrb[0].mxu0
  %v253 = vadd.f32 %v58, %v252
  %v254 = vpop.f32.mrb[0].mxu0
  %255 = vmatprep.mubr.f32.mxu0 0.0
  %256 = vmatmul.mubr.f32.gmra.mrb[0].mxu0 %v95
  %v257 = vpop.f32.mrb[0].mxu0
  %v258 = vadd.f32 %v58, %v257
  %v259 = vpop.f32.mrb[0].mxu0
  %260 = vmatprep.mubr.f32.mxu0 0.0
  %261 = vmatmul.mubr.f32.gmra.mrb[0].mxu0 %v98
  %v262 = vpop.f32.mrb[0].mxu0
  %v263 = vadd.f32 %v58, %v262
  %v264 = vpop.f32.mrb[0].mxu0
  %265 = vmatprep.mubr.f32.mxu0 0.0
  %266 = vmatmul.mubr.f32.gmra.mrb[0].mxu0 %v101
  %v267 = vpop.f32.mrb[0].mxu0
  %v268 = vadd.f32 %v58, %v267
  %v269 = vpop.f32.mrb[0].mxu0
  %270 = vmatprep.mubr.f32.mxu0 0.0
  %271 = vmatmul.mubr.f32.gmra.mrb[0].mxu0 %v104
  %v272 = vpop.f32.mrb[0].mxu0
  %v273 = vadd.f32 %v58, %v272
  %v274 = vpop.f32.mrb[0].mxu0
  %275 = vmatprep.mubr.f32.mxu0 0.0
  %276 = vmatmul.mubr.f32.gmra.mrb[0].mxu0 %v107
  %v277 = vpop.f32.mrb[0].mxu0
  %v278 = vadd.f32 %v58, %v277
  %v279 = vpop.f32.mrb[0].mxu0
  %280 = vmatprep.mubr.f32.mxu0 0.0
  %281 = vmatmul.mubr.f32.gmra.mrb[0].mxu0 %v110
  %v282 = vpop.f32.mrb[0].mxu0
  %v283 = vadd.f32 %v58, %v282
  %v284 = vpop.f32.mrb[0].mxu0
  %285 = vmatprep.mubr.f32.mxu0 0.0
  %286 = vmatmul.mubr.f32.gmra.mrb[0].mxu0 %v113
  %v287 = vpop.f32.mrb[0].mxu0
  %v288 = vadd.f32 %v58, %v287
  %v289 = vpop.f32.mrb[0].mxu0
  %290 = vmatprep.mubr.f32.mxu0 0.0
  %291 = vmatmul.mubr.f32.gmra.mrb[0].mxu0 %v116
  %v292 = vpop.f32.mrb[0].mxu0
  %v293 = vadd.f32 %v58, %v292
  %v294 = vpop.f32.mrb[0].mxu0
  %295 = vmatprep.mubr.f32.mxu0 0.0
  %296 = vmatmul.mubr.f32.gmra.mrb[0].mxu0 %v119
  %v297 = vpop.f32.mrb[0].mxu0
  %v298 = vadd.f32 %v58, %v297
  %v299 = vpop.f32.mrb[0].mxu0
  %300 = vmatprep.mubr.f32.mxu0 0.0
  %301 = vmatmul.mubr.f32.gmra.mrb[0].mxu0 %v122
  %v302 = vpop.f32.mrb[0].mxu0
  %v303 = vadd.f32 %v58, %v302
  %v304 = vpop.f32.mrb[0].mxu0
  %305 = vmatprep.mubr.f32.mxu0 0.0
  %306 = vmatmul.mubr.f32.gmra.mrb[0].mxu0 %v125
  %v307 = vpop.f32.mrb[0].mxu0
  %v308 = vadd.f32 %v58, %v307
  %v309 = vpop.f32.mrb[0].mxu0
  %310 = vmatprep.mubr.f32.mxu0 0.0
  %311 = vmatmul.mubr.f32.gmra.mrb[0].mxu0 %v128
  %v312 = vpop.f32.mrb[0].mxu0
  %v313 = vadd.f32 %v58, %v312
  %v314 = vpop.f32.mrb[0].mxu0
  %315 = vmatprep.mubr.f32.mxu0 0.0
  %316 = vmatmul.mubr.f32.gmra.mrb[0].mxu0 %v131
  %v317 = vpop.f32.mrb[0].mxu0
  %v318 = vadd.f32 %v58, %v317
  %v319 = vpop.f32.mrb[0].mxu0
  %320 = vmatprep.mubr.f32.mxu0 0.0
  %321 = vmatmul.mubr.f32.gmra.mrb[0].mxu0 %v134
  %v322 = vpop.f32.mrb[0].mxu0
  %v323 = vadd.f32 %v58, %v322
  %v324 = vpop.f32.mrb[0].mxu0
  %325 = vdwg.mxu0
  %v326 = vmax.f32 %v203, 0.0
  %v327 = vmax.f32 %v208, 0.0
  %v328 = vmax.f32 %v213, 0.0
  %v329 = vmax.f32 %v218, 0.0
  %v330 = vmax.f32 %v223, 0.0
  %v331 = vmax.f32 %v228, 0.0
  %v332 = vmax.f32 %v233, 0.0
  %v333 = vmax.f32 %v238, 0.0
  %v334 = vmax.f32 %v243, 0.0
  %v335 = vmax.f32 %v248, 0.0
  %v336 = vmax.f32 %v253, 0.0
  %v337 = vmax.f32 %v258, 0.0
  %v338 = vmax.f32 %v263, 0.0
  %v339 = vmax.f32 %v268, 0.0
  %v340 = vmax.f32 %v273, 0.0
  %v341 = vmax.f32 %v278, 0.0
  %v342 = vmax.f32 %v283, 0.0
  %v343 = vmax.f32 %v288, 0.0
  %v344 = vmax.f32 %v293, 0.0
  %v345 = vmax.f32 %v298, 0.0
  %v346 = vmax.f32 %v303, 0.0
  %v347 = vmax.f32 %v308, 0.0
  %v348 = vmax.f32 %v313, 0.0
  %v349 = vmax.f32 %v318, 0.0
  %v350 = vmax.f32 %v323, 0.0
  %v351 = vld [vmem:[%s3] sm:$0xff]
  %v352 = vld [vmem:[%s3 + $0x8] sm:$0xff]
  %v353 = vld [vmem:[%s3 + $0x10] sm:$0xff]
  %v354 = vld [vmem:[%s3 + $0x18] sm:$0xff]
  %v355 = vld [vmem:[%s4] sm:$0x1]
  %v357 = vlaneseq
  %v358 = vshrl.u32 %v357, 7
  %v359 = vsub.s32 0, %v358
  %v360 = vrot.slane %v355, %v359
  %vm362 = vcmask 261120
  %v364 = vsel %vm362, %v326, 0
  %v367 = vsel %vm362, %v327, 0
  %v370 = vsel %vm362, %v328, 0
  %v373 = vsel %vm362, %v329, 0
  %v376 = vsel %vm362, %v330, 0
  %v379 = vsel %vm362, %v331, 0
  %v382 = vsel %vm362, %v332, 0
  %v385 = vsel %vm362, %v333, 0
  %v388 = vsel %vm362, %v334, 0
  %v391 = vsel %vm362, %v335, 0
  %v394 = vsel %vm362, %v336, 0
  %v397 = vsel %vm362, %v337, 0
  %v400 = vsel %vm362, %v338, 0
  %v403 = vsel %vm362, %v339, 0
  %v406 = vsel %vm362, %v340, 0
  %v409 = vsel %vm362, %v341, 0
  %v412 = vsel %vm362, %v342, 0
  %v415 = vsel %vm362, %v343, 0
  %v418 = vsel %vm362, %v344, 0
  %v421 = vsel %vm362, %v345, 0
  %v424 = vsel %vm362, %v346, 0
  %v427 = vsel %vm362, %v347, 0
  %v430 = vsel %vm362, %v348, 0
  %v433 = vsel %vm362, %v349, 0
  %v436 = vsel %vm362, %v350, 0
  %438 = vmatprep.subr.mxu0 0.0
  %439 = vmatpush1.msra.mxu0 %v351
  %440 = vmatprep.subr.mxu0 0.0
  %441 = vmatpush1.msra.mxu0 %v352
  %442 = vmatprep.subr.mxu0 0.0
  %443 = vmatpush1.msra.mxu0 %v353
  %444 = vmatprep.subr.mxu0 0.0
  %445 = vmatpush1.msra.mxu0 %v354
  %446 = vmatprep.subr.mxu0 0.0
  %447 = vmatpush1.msra.mxu0 0.0
  %448 = vmatprep.subr.mxu0 0.0
  %449 = vmatpush1.msra.mxu0 0.0
  %450 = vmatprep.subr.mxu0 0.0
  %451 = vmatpush1.msra.mxu0 0.0
  %452 = vmatprep.subr.mxu0 0.0
  %453 = vmatpush1.msra.mxu0 0.0
  %454 = vmatprep.subr.mxu0 0.0
  %455 = vmatpush1.msra.mxu0 0.0
  %456 = vmatprep.subr.mxu0 0.0
  %457 = vmatpush1.msra.mxu0 0.0
  %458 = vmatprep.subr.mxu0 0.0
  %459 = vmatpush1.msra.mxu0 0.0
  %460 = vmatprep.subr.mxu0 0.0
  %461 = vmatpush1.msra.mxu0 0.0
  %462 = vmatprep.subr.mxu0 0.0
  %463 = vmatpush1.msra.mxu0 0.0
  %464 = vmatprep.subr.mxu0 0.0
  %465 = vmatpush1.msra.mxu0 0.0
  %466 = vmatprep.subr.mxu0 0.0
  %467 = vmatpush1.msra.mxu0 0.0
  %468 = vmatprep.subr.mxu0 0.0
  %469 = vmatpush1.msra.mxu0 0.0
  %470 = vmatprep.subr.mxu0 0.0
  %471 = vmatpush1.msra.mxu0 0.0
  %472 = vmatprep.subr.mxu0 0.0
  %473 = vmatpush1.msra.mxu0 0.0
  %474 = vmatprep.subr.mxu0 0.0
  %475 = vmatpush1.msra.mxu0 0.0
  %476 = vmatprep.subr.mxu0 0.0
  %477 = vmatpush1.msra.mxu0 0.0
  %478 = vmatprep.subr.mxu0 0.0
  %479 = vmatpush1.msra.mxu0 0.0
  %480 = vmatprep.subr.mxu0 0.0
  %481 = vmatpush1.msra.mxu0 0.0
  %482 = vmatprep.subr.mxu0 0.0
  %483 = vmatpush1.msra.mxu0 0.0
  %484 = vmatprep.subr.mxu0 0.0
  %485 = vmatpush1.msra.mxu0 0.0
  %486 = vmatprep.subr.mxu0 0.0
  %487 = vmatpush1.msra.mxu0 0.0
  %488 = vmatprep.subr.mxu0 0.0
  %489 = vmatpush1.msra.mxu0 0.0
  %490 = vmatprep.subr.mxu0 0.0
  %491 = vmatpush1.msra.mxu0 0.0
  %492 = vmatprep.subr.mxu0 0.0
  %493 = vmatpush1.msra.mxu0 0.0
  %494 = vmatprep.subr.mxu0 0.0
  %495 = vmatpush1.msra.mxu0 0.0
  %496 = vmatprep.subr.mxu0 0.0
  %497 = vmatpush1.msra.mxu0 0.0
  %498 = vmatprep.subr.mxu0 0.0
  %499 = vmatpush1.msra.mxu0 0.0
  %500 = vmatprep.subr.mxu0 0.0
  %501 = vmatpush1.msra.mxu0 0.0
  %502 = vmatprep.mubr.f32.mxu0 0.0
  %503 = vmatmul.mubr.f32.gmra.mrb[0].mxu0 %v364
  %v504 = vpop.f32.mrb[0].mxu0
  %v505 = vadd.f32 %v360, %v504
  %v506 = vpop.f32.mrb[0].mxu0
  %507 = vmatprep.mubr.f32.mxu0 0.0
  %508 = vmatmul.mubr.f32.gmra.mrb[0].mxu0 %v367
  %v509 = vpop.f32.mrb[0].mxu0
  %v510 = vadd.f32 %v360, %v509
  %v511 = vpop.f32.mrb[0].mxu0
  %512 = vmatprep.mubr.f32.mxu0 0.0
  %513 = vmatmul.mubr.f32.gmra.mrb[0].mxu0 %v370
  %v514 = vpop.f32.mrb[0].mxu0
  %v515 = vadd.f32 %v360, %v514
  %v516 = vpop.f32.mrb[0].mxu0
  %517 = vmatprep.mubr.f32.mxu0 0.0
  %518 = vmatmul.mubr.f32.gmra.mrb[0].mxu0 %v373
  %v519 = vpop.f32.mrb[0].mxu0
  %v520 = vadd.f32 %v360, %v519
  %v521 = vpop.f32.mrb[0].mxu0
  %522 = vmatprep.mubr.f32.mxu0 0.0
  %523 = vmatmul.mubr.f32.gmra.mrb[0].mxu0 %v376
  %v524 = vpop.f32.mrb[0].mxu0
  %v525 = vadd.f32 %v360, %v524
  %v526 = vpop.f32.mrb[0].mxu0
  %527 = vmatprep.mubr.f32.mxu0 0.0
  %528 = vmatmul.mubr.f32.gmra.mrb[0].mxu0 %v379
  %v529 = vpop.f32.mrb[0].mxu0
  %v530 = vadd.f32 %v360, %v529
  %v531 = vpop.f32.mrb[0].mxu0
  %532 = vmatprep.mubr.f32.mxu0 0.0
  %533 = vmatmul.mubr.f32.gmra.mrb[0].mxu0 %v382
  %v534 = vpop.f32.mrb[0].mxu0
  %v535 = vadd.f32 %v360, %v534
  %v536 = vpop.f32.mrb[0].mxu0
  %537 = vmatprep.mubr.f32.mxu0 0.0
  %538 = vmatmul.mubr.f32.gmra.mrb[0].mxu0 %v385
  %v539 = vpop.f32.mrb[0].mxu0
  %v540 = vadd.f32 %v360, %v539
  %v541 = vpop.f32.mrb[0].mxu0
  %542 = vmatprep.mubr.f32.mxu0 0.0
  %543 = vmatmul.mubr.f32.gmra.mrb[0].mxu0 %v388
  %v544 = vpop.f32.mrb[0].mxu0
  %v545 = vadd.f32 %v360, %v544
  %v546 = vpop.f32.mrb[0].mxu0
  %547 = vmatprep.mubr.f32.mxu0 0.0
  %548 = vmatmul.mubr.f32.gmra.mrb[0].mxu0 %v391
  %v549 = vpop.f32.mrb[0].mxu0
  %v550 = vadd.f32 %v360, %v549
  %v551 = vpop.f32.mrb[0].mxu0
  %552 = vmatprep.mubr.f32.mxu0 0.0
  %553 = vmatmul.mubr.f32.gmra.mrb[0].mxu0 %v394
  %v554 = vpop.f32.mrb[0].mxu0
  %v555 = vadd.f32 %v360, %v554
  %v556 = vpop.f32.mrb[0].mxu0
  %557 = vmatprep.mubr.f32.mxu0 0.0
  %558 = vmatmul.mubr.f32.gmra.mrb[0].mxu0 %v397
  %v559 = vpop.f32.mrb[0].mxu0
  %v560 = vadd.f32 %v360, %v559
  %v561 = vpop.f32.mrb[0].mxu0
  %562 = vmatprep.mubr.f32.mxu0 0.0
  %563 = vmatmul.mubr.f32.gmra.mrb[0].mxu0 %v400
  %v564 = vpop.f32.mrb[0].mxu0
  %v565 = vadd.f32 %v360, %v564
  %v566 = vpop.f32.mrb[0].mxu0
  %567 = vmatprep.mubr.f32.mxu0 0.0
  %568 = vmatmul.mubr.f32.gmra.mrb[0].mxu0 %v403
  %v569 = vpop.f32.mrb[0].mxu0
  %v570 = vadd.f32 %v360, %v569
  %v571 = vpop.f32.mrb[0].mxu0
  %572 = vmatprep.mubr.f32.mxu0 0.0
  %573 = vmatmul.mubr.f32.gmra.mrb[0].mxu0 %v406
  %v574 = vpop.f32.mrb[0].mxu0
  %v575 = vadd.f32 %v360, %v574
  %v576 = vpop.f32.mrb[0].mxu0
  %577 = vmatprep.mubr.f32.mxu0 0.0
  %578 = vmatmul.mubr.f32.gmra.mrb[0].mxu0 %v409
  %v579 = vpop.f32.mrb[0].mxu0
  %v580 = vadd.f32 %v360, %v579
  %v581 = vpop.f32.mrb[0].mxu0
  %582 = vmatprep.mubr.f32.mxu0 0.0
  %583 = vmatmul.mubr.f32.gmra.mrb[0].mxu0 %v412
  %v584 = vpop.f32.mrb[0].mxu0
  %v585 = vadd.f32 %v360, %v584
  %v586 = vpop.f32.mrb[0].mxu0
  %587 = vmatprep.mubr.f32.mxu0 0.0
  %588 = vmatmul.mubr.f32.gmra.mrb[0].mxu0 %v415
  %v589 = vpop.f32.mrb[0].mxu0
  %v590 = vadd.f32 %v360, %v589
  %v591 = vpop.f32.mrb[0].mxu0
  %592 = vmatprep.mubr.f32.mxu0 0.0
  %593 = vmatmul.mubr.f32.gmra.mrb[0].mxu0 %v418
  %v594 = vpop.f32.mrb[0].mxu0
  %v595 = vadd.f32 %v360, %v594
  %v596 = vpop.f32.mrb[0].mxu0
  %597 = vmatprep.mubr.f32.mxu0 0.0
  %598 = vmatmul.mubr.f32.gmra.mrb[0].mxu0 %v421
  %v599 = vpop.f32.mrb[0].mxu0
  %v600 = vadd.f32 %v360, %v599
  %v601 = vpop.f32.mrb[0].mxu0
  %602 = vmatprep.mubr.f32.mxu0 0.0
  %603 = vmatmul.mubr.f32.gmra.mrb[0].mxu0 %v424
  %v604 = vpop.f32.mrb[0].mxu0
  %v605 = vadd.f32 %v360, %v604
  %v606 = vpop.f32.mrb[0].mxu0
  %607 = vmatprep.mubr.f32.mxu0 0.0
  %608 = vmatmul.mubr.f32.gmra.mrb[0].mxu0 %v427
  %v609 = vpop.f32.mrb[0].mxu0
  %v610 = vadd.f32 %v360, %v609
  %v611 = vpop.f32.mrb[0].mxu0
  %612 = vmatprep.mubr.f32.mxu0 0.0
  %613 = vmatmul.mubr.f32.gmra.mrb[0].mxu0 %v430
  %v614 = vpop.f32.mrb[0].mxu0
  %v615 = vadd.f32 %v360, %v614
  %v616 = vpop.f32.mrb[0].mxu0
  %617 = vmatprep.mubr.f32.mxu0 0.0
  %618 = vmatmul.mubr.f32.gmra.mrb[0].mxu0 %v433
  %v619 = vpop.f32.mrb[0].mxu0
  %v620 = vadd.f32 %v360, %v619
  %v621 = vpop.f32.mrb[0].mxu0
  %622 = vmatprep.mubr.f32.mxu0 0.0
  %623 = vmatmul.mubr.f32.gmra.mrb[0].mxu0 %v436
  %v624 = vpop.f32.mrb[0].mxu0
  %v625 = vadd.f32 %v360, %v624
  %v626 = vpop.f32.mrb[0].mxu0
  %627 = vdwg.mxu0
  %v628 = vmax.f32 %v505, 0.0
  %v629 = vmax.f32 %v510, 0.0
  %v630 = vmax.f32 %v515, 0.0
  %v631 = vmax.f32 %v520, 0.0
  %v632 = vmax.f32 %v525, 0.0
  %v633 = vmax.f32 %v530, 0.0
  %v634 = vmax.f32 %v535, 0.0
  %v635 = vmax.f32 %v540, 0.0
  %v636 = vmax.f32 %v545, 0.0
  %v637 = vmax.f32 %v550, 0.0
  %v638 = vmax.f32 %v555, 0.0
  %v639 = vmax.f32 %v560, 0.0
  %v640 = vmax.f32 %v565, 0.0
  %v641 = vmax.f32 %v570, 0.0
  %v642 = vmax.f32 %v575, 0.0
  %v643 = vmax.f32 %v580, 0.0
  %v644 = vmax.f32 %v585, 0.0
  %v645 = vmax.f32 %v590, 0.0
  %v646 = vmax.f32 %v595, 0.0
  %v647 = vmax.f32 %v600, 0.0
  %v648 = vmax.f32 %v605, 0.0
  %v649 = vmax.f32 %v610, 0.0
  %v650 = vmax.f32 %v615, 0.0
  %v651 = vmax.f32 %v620, 0.0
  %v652 = vmax.f32 %v625, 0.0
  %v653 = vld [vmem:[%s5] sm:$0xff]
  %v654 = vld [vmem:[%s5 + $0x8] sm:$0xff]
  %v655 = vld [vmem:[%s5 + $0x10] sm:$0xff]
  %v656 = vld [vmem:[%s5 + $0x18] sm:$0xff]
  %v657 = vld [vmem:[%s6] sm:$0x1]
  %v659 = vlaneseq
  %v660 = vshrl.u32 %v659, 7
  %v661 = vsub.s32 0, %v660
  %v662 = vrot.slane %v657, %v661
  %v665 = vsel %vm362, %v628, 0
  %v668 = vsel %vm362, %v629, 0
  %v671 = vsel %vm362, %v630, 0
  %v674 = vsel %vm362, %v631, 0
  %v677 = vsel %vm362, %v632, 0
  %v680 = vsel %vm362, %v633, 0
  %v683 = vsel %vm362, %v634, 0
  %v686 = vsel %vm362, %v635, 0
  %v689 = vsel %vm362, %v636, 0
  %v692 = vsel %vm362, %v637, 0
  %v695 = vsel %vm362, %v638, 0
  %v698 = vsel %vm362, %v639, 0
  %v701 = vsel %vm362, %v640, 0
  %v704 = vsel %vm362, %v641, 0
  %v707 = vsel %vm362, %v642, 0
  %v710 = vsel %vm362, %v643, 0
  %v713 = vsel %vm362, %v644, 0
  %v716 = vsel %vm362, %v645, 0
  %v719 = vsel %vm362, %v646, 0
  %v722 = vsel %vm362, %v647, 0
  %v725 = vsel %vm362, %v648, 0
  %v728 = vsel %vm362, %v649, 0
  %v731 = vsel %vm362, %v650, 0
  %v734 = vsel %vm362, %v651, 0
  %v737 = vsel %vm362, %v652, 0
  %739 = vmatprep.subr.mxu0 0.0
  %740 = vmatpush1.msra.mxu0 %v653
  %741 = vmatprep.subr.mxu0 0.0
  %742 = vmatpush1.msra.mxu0 %v654
  %743 = vmatprep.subr.mxu0 0.0
  %744 = vmatpush1.msra.mxu0 %v655
  %745 = vmatprep.subr.mxu0 0.0
  %746 = vmatpush1.msra.mxu0 %v656
  %747 = vmatprep.subr.mxu0 0.0
  %748 = vmatpush1.msra.mxu0 0.0
  %749 = vmatprep.subr.mxu0 0.0
  %750 = vmatpush1.msra.mxu0 0.0
  %751 = vmatprep.subr.mxu0 0.0
  %752 = vmatpush1.msra.mxu0 0.0
  %753 = vmatprep.subr.mxu0 0.0
  %754 = vmatpush1.msra.mxu0 0.0
  %755 = vmatprep.subr.mxu0 0.0
  %756 = vmatpush1.msra.mxu0 0.0
  %757 = vmatprep.subr.mxu0 0.0
  %758 = vmatpush1.msra.mxu0 0.0
  %759 = vmatprep.subr.mxu0 0.0
  %760 = vmatpush1.msra.mxu0 0.0
  %761 = vmatprep.subr.mxu0 0.0
  %762 = vmatpush1.msra.mxu0 0.0
  %763 = vmatprep.subr.mxu0 0.0
  %764 = vmatpush1.msra.mxu0 0.0
  %765 = vmatprep.subr.mxu0 0.0
  %766 = vmatpush1.msra.mxu0 0.0
  %767 = vmatprep.subr.mxu0 0.0
  %768 = vmatpush1.msra.mxu0 0.0
  %769 = vmatprep.subr.mxu0 0.0
  %770 = vmatpush1.msra.mxu0 0.0
  %771 = vmatprep.subr.mxu0 0.0
  %772 = vmatpush1.msra.mxu0 0.0
  %773 = vmatprep.subr.mxu0 0.0
  %774 = vmatpush1.msra.mxu0 0.0
  %775 = vmatprep.subr.mxu0 0.0
  %776 = vmatpush1.msra.mxu0 0.0
  %777 = vmatprep.subr.mxu0 0.0
  %778 = vmatpush1.msra.mxu0 0.0
  %779 = vmatprep.subr.mxu0 0.0
  %780 = vmatpush1.msra.mxu0 0.0
  %781 = vmatprep.subr.mxu0 0.0
  %782 = vmatpush1.msra.mxu0 0.0
  %783 = vmatprep.subr.mxu0 0.0
  %784 = vmatpush1.msra.mxu0 0.0
  %785 = vmatprep.subr.mxu0 0.0
  %786 = vmatpush1.msra.mxu0 0.0
  %787 = vmatprep.subr.mxu0 0.0
  %788 = vmatpush1.msra.mxu0 0.0
  %789 = vmatprep.subr.mxu0 0.0
  %790 = vmatpush1.msra.mxu0 0.0
  %791 = vmatprep.subr.mxu0 0.0
  %792 = vmatpush1.msra.mxu0 0.0
  %793 = vmatprep.subr.mxu0 0.0
  %794 = vmatpush1.msra.mxu0 0.0
  %795 = vmatprep.subr.mxu0 0.0
  %796 = vmatpush1.msra.mxu0 0.0
  %797 = vmatprep.subr.mxu0 0.0
  %798 = vmatpush1.msra.mxu0 0.0
  %799 = vmatprep.subr.mxu0 0.0
  %800 = vmatpush1.msra.mxu0 0.0
  %801 = vmatprep.subr.mxu0 0.0
  %802 = vmatpush1.msra.mxu0 0.0
  %803 = vmatprep.mubr.f32.mxu0 0.0
  %804 = vmatmul.mubr.f32.gmra.mrb[0].mxu0 %v665
  %v805 = vpop.f32.mrb[0].mxu0
  %v806 = vadd.f32 %v662, %v805
  %v807 = vpop.f32.mrb[0].mxu0
  %808 = vmatprep.mubr.f32.mxu0 0.0
  %809 = vmatmul.mubr.f32.gmra.mrb[0].mxu0 %v668
  %v810 = vpop.f32.mrb[0].mxu0
  %v811 = vadd.f32 %v662, %v810
  %v812 = vpop.f32.mrb[0].mxu0
  %813 = vmatprep.mubr.f32.mxu0 0.0
  %814 = vmatmul.mubr.f32.gmra.mrb[0].mxu0 %v671
  %v815 = vpop.f32.mrb[0].mxu0
  %v816 = vadd.f32 %v662, %v815
  %v817 = vpop.f32.mrb[0].mxu0
  %818 = vmatprep.mubr.f32.mxu0 0.0
  %819 = vmatmul.mubr.f32.gmra.mrb[0].mxu0 %v674
  %v820 = vpop.f32.mrb[0].mxu0
  %v821 = vadd.f32 %v662, %v820
  %v822 = vpop.f32.mrb[0].mxu0
  %823 = vmatprep.mubr.f32.mxu0 0.0
  %824 = vmatmul.mubr.f32.gmra.mrb[0].mxu0 %v677
  %v825 = vpop.f32.mrb[0].mxu0
  %v826 = vadd.f32 %v662, %v825
  %v827 = vpop.f32.mrb[0].mxu0
  %828 = vmatprep.mubr.f32.mxu0 0.0
  %829 = vmatmul.mubr.f32.gmra.mrb[0].mxu0 %v680
  %v830 = vpop.f32.mrb[0].mxu0
  %v831 = vadd.f32 %v662, %v830
  %v832 = vpop.f32.mrb[0].mxu0
  %833 = vmatprep.mubr.f32.mxu0 0.0
  %834 = vmatmul.mubr.f32.gmra.mrb[0].mxu0 %v683
  %v835 = vpop.f32.mrb[0].mxu0
  %v836 = vadd.f32 %v662, %v835
  %v837 = vpop.f32.mrb[0].mxu0
  %838 = vmatprep.mubr.f32.mxu0 0.0
  %839 = vmatmul.mubr.f32.gmra.mrb[0].mxu0 %v686
  %v840 = vpop.f32.mrb[0].mxu0
  %v841 = vadd.f32 %v662, %v840
  %v842 = vpop.f32.mrb[0].mxu0
  %843 = vmatprep.mubr.f32.mxu0 0.0
  %844 = vmatmul.mubr.f32.gmra.mrb[0].mxu0 %v689
  %v845 = vpop.f32.mrb[0].mxu0
  %v846 = vadd.f32 %v662, %v845
  %v847 = vpop.f32.mrb[0].mxu0
  %848 = vmatprep.mubr.f32.mxu0 0.0
  %849 = vmatmul.mubr.f32.gmra.mrb[0].mxu0 %v692
  %v850 = vpop.f32.mrb[0].mxu0
  %v851 = vadd.f32 %v662, %v850
  %v852 = vpop.f32.mrb[0].mxu0
  %853 = vmatprep.mubr.f32.mxu0 0.0
  %854 = vmatmul.mubr.f32.gmra.mrb[0].mxu0 %v695
  %v855 = vpop.f32.mrb[0].mxu0
  %v856 = vadd.f32 %v662, %v855
  %v857 = vpop.f32.mrb[0].mxu0
  %858 = vmatprep.mubr.f32.mxu0 0.0
  %859 = vmatmul.mubr.f32.gmra.mrb[0].mxu0 %v698
  %v860 = vpop.f32.mrb[0].mxu0
  %v861 = vadd.f32 %v662, %v860
  %v862 = vpop.f32.mrb[0].mxu0
  %863 = vmatprep.mubr.f32.mxu0 0.0
  %864 = vmatmul.mubr.f32.gmra.mrb[0].mxu0 %v701
  %v865 = vpop.f32.mrb[0].mxu0
  %v866 = vadd.f32 %v662, %v865
  %v867 = vpop.f32.mrb[0].mxu0
  %868 = vmatprep.mubr.f32.mxu0 0.0
  %869 = vmatmul.mubr.f32.gmra.mrb[0].mxu0 %v704
  %v870 = vpop.f32.mrb[0].mxu0
  %v871 = vadd.f32 %v662, %v870
  %v872 = vpop.f32.mrb[0].mxu0
  %873 = vmatprep.mubr.f32.mxu0 0.0
  %874 = vmatmul.mubr.f32.gmra.mrb[0].mxu0 %v707
  %v875 = vpop.f32.mrb[0].mxu0
  %v876 = vadd.f32 %v662, %v875
  %v877 = vpop.f32.mrb[0].mxu0
  %878 = vmatprep.mubr.f32.mxu0 0.0
  %879 = vmatmul.mubr.f32.gmra.mrb[0].mxu0 %v710
  %v880 = vpop.f32.mrb[0].mxu0
  %v881 = vadd.f32 %v662, %v880
  %v882 = vpop.f32.mrb[0].mxu0
  %883 = vmatprep.mubr.f32.mxu0 0.0
  %884 = vmatmul.mubr.f32.gmra.mrb[0].mxu0 %v713
  %v885 = vpop.f32.mrb[0].mxu0
  %v886 = vadd.f32 %v662, %v885
  %v887 = vpop.f32.mrb[0].mxu0
  %888 = vmatprep.mubr.f32.mxu0 0.0
  %889 = vmatmul.mubr.f32.gmra.mrb[0].mxu0 %v716
  %v890 = vpop.f32.mrb[0].mxu0
  %v891 = vadd.f32 %v662, %v890
  %v892 = vpop.f32.mrb[0].mxu0
  %893 = vmatprep.mubr.f32.mxu0 0.0
  %894 = vmatmul.mubr.f32.gmra.mrb[0].mxu0 %v719
  %v895 = vpop.f32.mrb[0].mxu0
  %v896 = vadd.f32 %v662, %v895
  %v897 = vpop.f32.mrb[0].mxu0
  %898 = vmatprep.mubr.f32.mxu0 0.0
  %899 = vmatmul.mubr.f32.gmra.mrb[0].mxu0 %v722
  %v900 = vpop.f32.mrb[0].mxu0
  %v901 = vadd.f32 %v662, %v900
  %v902 = vpop.f32.mrb[0].mxu0
  %903 = vmatprep.mubr.f32.mxu0 0.0
  %904 = vmatmul.mubr.f32.gmra.mrb[0].mxu0 %v725
  %v905 = vpop.f32.mrb[0].mxu0
  %v906 = vadd.f32 %v662, %v905
  %v907 = vpop.f32.mrb[0].mxu0
  %908 = vmatprep.mubr.f32.mxu0 0.0
  %909 = vmatmul.mubr.f32.gmra.mrb[0].mxu0 %v728
  %v910 = vpop.f32.mrb[0].mxu0
  %v911 = vadd.f32 %v662, %v910
  %v912 = vpop.f32.mrb[0].mxu0
  %913 = vmatprep.mubr.f32.mxu0 0.0
  %914 = vmatmul.mubr.f32.gmra.mrb[0].mxu0 %v731
  %v915 = vpop.f32.mrb[0].mxu0
  %v916 = vadd.f32 %v662, %v915
  %v917 = vpop.f32.mrb[0].mxu0
  %918 = vmatprep.mubr.f32.mxu0 0.0
  %919 = vmatmul.mubr.f32.gmra.mrb[0].mxu0 %v734
  %v920 = vpop.f32.mrb[0].mxu0
  %v921 = vadd.f32 %v662, %v920
  %v922 = vpop.f32.mrb[0].mxu0
  %923 = vmatprep.mubr.f32.mxu0 0.0
  %924 = vmatmul.mubr.f32.gmra.mrb[0].mxu0 %v737
  %v925 = vpop.f32.mrb[0].mxu0
  %v926 = vadd.f32 %v662, %v925
  %v927 = vpop.f32.mrb[0].mxu0
  %928 = vdwg.mxu0
  %v929 = vxor.u32 %v806, 2147483648
  %v930 = vxor.u32 %v811, 2147483648
  %v931 = vxor.u32 %v816, 2147483648
  %v932 = vxor.u32 %v821, 2147483648
  %v933 = vxor.u32 %v826, 2147483648
  %v934 = vxor.u32 %v831, 2147483648
  %v935 = vxor.u32 %v836, 2147483648
  %v936 = vxor.u32 %v841, 2147483648
  %v937 = vxor.u32 %v846, 2147483648
  %v938 = vxor.u32 %v851, 2147483648
  %v939 = vxor.u32 %v856, 2147483648
  %v940 = vxor.u32 %v861, 2147483648
  %v941 = vxor.u32 %v866, 2147483648
  %v942 = vxor.u32 %v871, 2147483648
  %v943 = vxor.u32 %v876, 2147483648
  %v944 = vxor.u32 %v881, 2147483648
  %v945 = vxor.u32 %v886, 2147483648
  %v946 = vxor.u32 %v891, 2147483648
  %v947 = vxor.u32 %v896, 2147483648
  %v948 = vxor.u32 %v901, 2147483648
  %v949 = vxor.u32 %v906, 2147483648
  %v950 = vxor.u32 %v911, 2147483648
  %v951 = vxor.u32 %v916, 2147483648
  %v952 = vxor.u32 %v921, 2147483648
  %v953 = vxor.u32 %v926, 2147483648
  %v954 = vmul.f32 %v929, 1.442695
  %v955 = vpow.pop %v954
  %v956 = vmul.f32 %v930, 1.442695
  %v957 = vpow.pop %v956
  %v958 = vmul.f32 %v931, 1.442695
  %v959 = vpow.pop %v958
  %v960 = vmul.f32 %v932, 1.442695
  %v961 = vpow.pop %v960
  %v962 = vmul.f32 %v933, 1.442695
  %v963 = vpow.pop %v962
  %v964 = vmul.f32 %v934, 1.442695
  %v965 = vpow.pop %v964
  %v966 = vmul.f32 %v935, 1.442695
  %v967 = vpow.pop %v966
  %v968 = vmul.f32 %v936, 1.442695
  %v969 = vpow.pop %v968
  %v970 = vmul.f32 %v937, 1.442695
  %v971 = vpow.pop %v970
  %v972 = vmul.f32 %v938, 1.442695
  %v973 = vpow.pop %v972
  %v974 = vmul.f32 %v939, 1.442695
  %v975 = vpow.pop %v974
  %v976 = vmul.f32 %v940, 1.442695
  %v977 = vpow.pop %v976
  %v978 = vmul.f32 %v941, 1.442695
  %v979 = vpow.pop %v978
  %v980 = vmul.f32 %v942, 1.442695
  %v981 = vpow.pop %v980
  %v982 = vmul.f32 %v943, 1.442695
  %v983 = vpow.pop %v982
  %v984 = vmul.f32 %v944, 1.442695
  %v985 = vpow.pop %v984
  %v986 = vmul.f32 %v945, 1.442695
  %v987 = vpow.pop %v986
  %v988 = vmul.f32 %v946, 1.442695
  %v989 = vpow.pop %v988
  %v990 = vmul.f32 %v947, 1.442695
  %v991 = vpow.pop %v990
  %v992 = vmul.f32 %v948, 1.442695
  %v993 = vpow.pop %v992
  %v994 = vmul.f32 %v949, 1.442695
  %v995 = vpow.pop %v994
  %v996 = vmul.f32 %v950, 1.442695
  %v997 = vpow.pop %v996
  %v998 = vmul.f32 %v951, 1.442695
  %v999 = vpow.pop %v998
  %v1000 = vmul.f32 %v952, 1.442695
  %v1001 = vpow.pop %v1000
  %v1002 = vmul.f32 %v953, 1.442695
  %v1003 = vpow.pop %v1002
  %v1004 = vadd.f32 %v955, 1.0
  %v1005 = vadd.f32 %v957, 1.0
  %v1006 = vadd.f32 %v959, 1.0
  %v1007 = vadd.f32 %v961, 1.0
  %v1008 = vadd.f32 %v963, 1.0
  %v1009 = vadd.f32 %v965, 1.0
  %v1010 = vadd.f32 %v967, 1.0
  %v1011 = vadd.f32 %v969, 1.0
  %v1012 = vadd.f32 %v971, 1.0
  %v1013 = vadd.f32 %v973, 1.0
  %v1014 = vadd.f32 %v975, 1.0
  %v1015 = vadd.f32 %v977, 1.0
  %v1016 = vadd.f32 %v979, 1.0
  %v1017 = vadd.f32 %v981, 1.0
  %v1018 = vadd.f32 %v983, 1.0
  %v1019 = vadd.f32 %v985, 1.0
  %v1020 = vadd.f32 %v987, 1.0
  %v1021 = vadd.f32 %v989, 1.0
  %v1022 = vadd.f32 %v991, 1.0
  %v1023 = vadd.f32 %v993, 1.0
  %v1024 = vadd.f32 %v995, 1.0
  %v1025 = vadd.f32 %v997, 1.0
  %v1026 = vadd.f32 %v999, 1.0
  %v1027 = vadd.f32 %v1001, 1.0
  %v1028 = vadd.f32 %v1003, 1.0
  %v1029 = vrcp.pop %v1004
  %v1030 = vmul.f32 1.0, %v1029
  %v1031 = vrcp.pop %v1005
  %v1032 = vmul.f32 1.0, %v1031
  %v1033 = vrcp.pop %v1006
  %v1034 = vmul.f32 1.0, %v1033
  %v1035 = vrcp.pop %v1007
  %v1036 = vmul.f32 1.0, %v1035
  %v1037 = vrcp.pop %v1008
  %v1038 = vmul.f32 1.0, %v1037
  %v1039 = vrcp.pop %v1009
  %v1040 = vmul.f32 1.0, %v1039
  %v1041 = vrcp.pop %v1010
  %v1042 = vmul.f32 1.0, %v1041
  %v1043 = vrcp.pop %v1011
  %v1044 = vmul.f32 1.0, %v1043
  %v1045 = vrcp.pop %v1012
  %v1046 = vmul.f32 1.0, %v1045
  %v1047 = vrcp.pop %v1013
  %v1048 = vmul.f32 1.0, %v1047
  %v1049 = vrcp.pop %v1014
  %v1050 = vmul.f32 1.0, %v1049
  %v1051 = vrcp.pop %v1015
  %v1052 = vmul.f32 1.0, %v1051
  %v1053 = vrcp.pop %v1016
  %v1054 = vmul.f32 1.0, %v1053
  %v1055 = vrcp.pop %v1017
  %v1056 = vmul.f32 1.0, %v1055
  %v1057 = vrcp.pop %v1018
  %v1058 = vmul.f32 1.0, %v1057
  %v1059 = vrcp.pop %v1019
  %v1060 = vmul.f32 1.0, %v1059
  %v1061 = vrcp.pop %v1020
  %v1062 = vmul.f32 1.0, %v1061
  %v1063 = vrcp.pop %v1021
  %v1064 = vmul.f32 1.0, %v1063
  %v1065 = vrcp.pop %v1022
  %v1066 = vmul.f32 1.0, %v1065
  %v1067 = vrcp.pop %v1023
  %v1068 = vmul.f32 1.0, %v1067
  %v1069 = vrcp.pop %v1024
  %v1070 = vmul.f32 1.0, %v1069
  %v1071 = vrcp.pop %v1025
  %v1072 = vmul.f32 1.0, %v1071
  %v1073 = vrcp.pop %v1026
  %v1074 = vmul.f32 1.0, %v1073
  %v1075 = vrcp.pop %v1027
  %v1076 = vmul.f32 1.0, %v1075
  %v1077 = vrcp.pop %v1028
  %v1078 = vmul.f32 1.0, %v1077
  %vm1079 = vcmask 64512
  %1080 = vst.msk [vmem:[%s7] sm:$0xff] %vm1079, %v1030
  %1081 = vst.msk [vmem:[%s7 + $0x8] sm:$0xff] %vm1079, %v1032
  %1082 = vst.msk [vmem:[%s7 + $0x10] sm:$0xff] %vm1079, %v1034
  %1083 = vst.msk [vmem:[%s7 + $0x18] sm:$0xff] %vm1079, %v1036
  %1084 = vst.msk [vmem:[%s7 + $0x20] sm:$0xff] %vm1079, %v1038
  %1085 = vst.msk [vmem:[%s7 + $0x28] sm:$0xff] %vm1079, %v1040
  %1086 = vst.msk [vmem:[%s7 + $0x30] sm:$0xff] %vm1079, %v1042
  %1087 = vst.msk [vmem:[%s7 + $0x38] sm:$0xff] %vm1079, %v1044
  %1088 = vst.msk [vmem:[%s7 + $0x40] sm:$0xff] %vm1079, %v1046
  %1089 = vst.msk [vmem:[%s7 + $0x48] sm:$0xff] %vm1079, %v1048
  %1090 = vst.msk [vmem:[%s7 + $0x50] sm:$0xff] %vm1079, %v1050
  %1091 = vst.msk [vmem:[%s7 + $0x58] sm:$0xff] %vm1079, %v1052
  %1092 = vst.msk [vmem:[%s7 + $0x60] sm:$0xff] %vm1079, %v1054
  %1093 = vst.msk [vmem:[%s7 + $0x68] sm:$0xff] %vm1079, %v1056
  %1094 = vst.msk [vmem:[%s7 + $0x70] sm:$0xff] %vm1079, %v1058
  %1095 = vst.msk [vmem:[%s7 + $0x78] sm:$0xff] %vm1079, %v1060
  %1096 = vst.msk [vmem:[%s7 + $0x80] sm:$0xff] %vm1079, %v1062
  %1097 = vst.msk [vmem:[%s7 + $0x88] sm:$0xff] %vm1079, %v1064
  %1098 = vst.msk [vmem:[%s7 + $0x90] sm:$0xff] %vm1079, %v1066
  %1099 = vst.msk [vmem:[%s7 + $0x98] sm:$0xff] %vm1079, %v1068
  %1100 = vst.msk [vmem:[%s7 + $0xa0] sm:$0xff] %vm1079, %v1070
  %1101 = vst.msk [vmem:[%s7 + $0xa8] sm:$0xff] %vm1079, %v1072
  %1102 = vst.msk [vmem:[%s7 + $0xb0] sm:$0xff] %vm1079, %v1074
  %1103 = vst.msk [vmem:[%s7 + $0xb8] sm:$0xff] %vm1079, %v1076
  %1104 = vst.msk [vmem:[%s7 + $0xc0] sm:$0xff] %vm1079, %v1078
  // Predicated region
  $region30: #{tpu_custom_call.1} parent=0 // pred_check
    _
  $region31: #{tpu_custom_call.1} parent=0 // pred_check_branch
    %1106 = sbr.rel (0) target = $region33
  $region32: #{tpu_custom_call.1} parent=0 // pred_region
    _
  $region33: #{tpu_custom_call.1} parent=0 // pred_fallthru
    _
  // Predicated region
  $region34: #{tpu_custom_call.1} parent=0 // pred_check
    _
  $region35: #{tpu_custom_call.1} parent=0 // pred_check_branch
    %1108 = sbr.rel (0) target = $region37
  $region36: #{tpu_custom_call.1} parent=0 // pred_region
    _
  $region37: #{tpu_custom_call.1} parent=0 // pred_fallthru
    _

</llo_original>
